<compile_context>
chip_gen: v5e
topology: v5e:2x2
jax: 0.10.0
libtpu: 0.0.40
codegen_flags: <defaults>
</compile_context>

<pallas_src>
import jax
import jax.numpy as jnp
from jax import lax
from jax.experimental import pallas as pl
from jax.experimental.pallas import tpu as pltpu

INPUT_SIZE = 28
HIDDEN = 64
NUM_CLASSES = 10
C_PAD = 128  # lane-dense logits block; real classes sliced in the wrapper


def lstm_linear_kernel(x_ref, w_ih_ref, w_hh_ref, b_ref, w_out_ref, b_out_ref,
                       out_ref, xproj_ref):
    """One grid step == one batch tile of sequences.

    x_ref:     (T, BT, I)      time-major input slab for this batch tile
    w_ih_ref:  (I, 4H)         input->gate weights, gate order [i, f, o, g]
    w_hh_ref:  (H, 4H)         hidden->gate weights, same gate order
    b_ref:     (1, 4H)         combined bias (b_ih + b_hh), same gate order
    w_out_ref: (H, C_PAD)      final Linear weight (pre-transposed, lane-padded)
    b_out_ref: (1, C_PAD)      final Linear bias (lane-padded)
    out_ref:   (BT, C_PAD)     lane-dense logits for this batch tile
    xproj_ref: (T*BT, 4H)      VMEM scratch: hoisted input projection
    """
    T, BT, I = x_ref.shape
    H = w_hh_ref.shape[0]

    # Hoisted input projection for the whole (time, batch-tile) slab: one big matmul,
    # combined bias folded in once, completely off the serial h-chain.
    x2d = x_ref[...].reshape(T * BT, I)
    xproj_ref[...] = (
        jnp.dot(x2d, w_ih_ref[...], preferred_element_type=jnp.float32)
        + b_ref[...]
    )

    w_hh = w_hh_ref[...]

    def step(t, carry):
        h, c = carry
        # Only this matmul (and the two activations) sit on the recurrence path.
        start = pl.multiple_of(t * BT, BT)
        gates = xproj_ref[pl.ds(start, BT), :] + jnp.dot(
            h.astype(w_hh.dtype), w_hh, preferred_element_type=jnp.float32)  # (BT, 4H)
        # Gate layout [i | f | o | g]: one wide sigmoid + one tanh per step.
        sig = jax.nn.sigmoid(gates[:, :3 * H])
        g_g = jnp.tanh(gates[:, 3 * H:])
        i_g = sig[:, 0 * H:1 * H]
        f_g = sig[:, 1 * H:2 * H]
        o_g = sig[:, 2 * H:3 * H]
        c_new = f_g * c + i_g * g_g
        h_new = o_g * jnp.tanh(c_new)
        return (h_new, c_new)

    h0 = jnp.zeros((BT, HIDDEN), jnp.float32)
    c0 = jnp.zeros((BT, HIDDEN), jnp.float32)
    # T is small & static: fully unroll so the scheduler sees across iterations.
    h_last, _ = lax.fori_loop(0, T, step, (h0, c0), unroll=True)

    # Final Linear on the last hidden state, written lane-dense (C_PAD=128).
    out_ref[...] = (
        jnp.dot(h_last, w_out_ref[...], preferred_element_type=jnp.float32)
        + b_out_ref[...]
    )


def rnn_forward(x, params, *, block_b=None, compute_dtype=jnp.float32):
    """x: (B, T, INPUT_SIZE) float32, batch_first like the PyTorch module.

    compute_dtype=jnp.bfloat16 selects the MXU-native operand path (f32 accumulation
    is kept inside the kernel); expect bf16-level differences vs. an f32 reference.
    """
    w_ih, w_hh, b_gates, w_out, b_out = params
    B, T, I = x.shape
    G = 4 * HIDDEN

    # Batch tile: >= sublane minimum (8 for f32, 16 for bf16 packing), grow toward
    # the MXU M dimension (128) for large batches.
    sublane_min = 8 if compute_dtype == jnp.float32 else 16
    if block_b is None:
        block_b = min(128, max(sublane_min, int(pl.next_power_of_2(B))))
    else:
        block_b = max(int(block_b), sublane_min)
    b_pad = pl.cdiv(B, block_b) * block_b
    n_tiles = b_pad // block_b

    # Time-major, batch-padded input so per-step gate slabs are contiguous rows of
    # the hoisted projection scratch.
    x_tm = jnp.transpose(x, (1, 0, 2))
    if b_pad != B:
        x_tm = jnp.pad(x_tm, ((0, 0), (0, b_pad - B), (0, 0)))

    if compute_dtype != jnp.float32:
        x_tm = x_tm.astype(compute_dtype)
        w_ih = w_ih.astype(compute_dtype)
        w_hh = w_hh.astype(compute_dtype)

    # Lane-dense final Linear: pad the 10 output classes up to 128 lanes (zeros).
    w_out_p = jnp.pad(w_out, ((0, 0), (0, C_PAD - NUM_CLASSES)))
    b_out_p = jnp.pad(b_out, ((0, 0), (0, C_PAD - NUM_CLASSES)))

    out = pl.pallas_call(
        lstm_linear_kernel,
        out_shape=jax.ShapeDtypeStruct((b_pad, C_PAD), jnp.float32),
        grid=(n_tiles,),
        in_specs=[
            pl.BlockSpec((T, block_b, I), lambda i: (0, i, 0)),      # x slab (time-major)
            pl.BlockSpec((I, G), lambda i: (0, 0)),                  # w_ih (resident)
            pl.BlockSpec((HIDDEN, G), lambda i: (0, 0)),             # w_hh
            pl.BlockSpec((1, G), lambda i: (0, 0)),                  # combined bias
            pl.BlockSpec((HIDDEN, C_PAD), lambda i: (0, 0)),         # w_out (padded)
            pl.BlockSpec((1, C_PAD), lambda i: (0, 0)),              # b_out (padded)
        ],
        out_specs=pl.BlockSpec((block_b, C_PAD), lambda i: (i, 0)),
        scratch_shapes=[pltpu.VMEM((T * block_b, G), jnp.float32)],
        # Independent batch tiles: shards across the two TensorCores on v7x when
        # n_tiles >= 2 (pick block_b so n_tiles is even for full v7x occupancy).
        compiler_params=pltpu.CompilerParams(dimension_semantics=("parallel",)),
    )(x_tm, w_ih, w_hh, b_gates, w_out_p, b_out_p)
    return out[:B, :NUM_CLASSES]


def init_params(key):
    """Deterministic init matching PyTorch shapes:
    LSTM: weight_ih (4H, I), weight_hh (4H, H), bias_ih (4H,), bias_hh (4H,)
    Linear: weight (C, H), bias (C,)
    Gate rows are permuted from PyTorch order [i, f, g, o] to [i, f, o, g] and the
    weights are pre-transposed for right-multiplication inside the kernel."""
    k = jax.random.split(key, 6)
    bound = 1.0 / jnp.sqrt(HIDDEN)
    w_ih = jax.random.uniform(k[0], (4 * HIDDEN, INPUT_SIZE), jnp.float32, -bound, bound)
    w_hh = jax.random.uniform(k[1], (4 * HIDDEN, HIDDEN), jnp.float32, -bound, bound)
    b_ih = jax.random.uniform(k[2], (4 * HIDDEN,), jnp.float32, -bound, bound)
    b_hh = jax.random.uniform(k[3], (4 * HIDDEN,), jnp.float32, -bound, bound)
    w_out = jax.random.uniform(k[4], (NUM_CLASSES, HIDDEN), jnp.float32, -bound, bound)
    b_out = jax.random.uniform(k[5], (NUM_CLASSES,), jnp.float32, -bound, bound)

    # [i, f, g, o] -> [i, f, o, g]: the three sigmoid gates become contiguous, so
    # the kernel does one sigmoid over [:, :3H] and one tanh over [:, 3H:].
    perm = jnp.concatenate([
        jnp.arange(0 * HIDDEN, 1 * HIDDEN),   # i
        jnp.arange(1 * HIDDEN, 2 * HIDDEN),   # f
        jnp.arange(3 * HIDDEN, 4 * HIDDEN),   # o
        jnp.arange(2 * HIDDEN, 3 * HIDDEN),   # g
    ])
    w_ih = w_ih[perm]
    w_hh = w_hh[perm]
    b = (b_ih + b_hh)[perm]

    return (
        w_ih.T,            # (I, 4H)
        w_hh.T,            # (H, 4H)
        b[None, :],        # (1, 4H)
        w_out.T,           # (H, C)
        b_out[None, :],    # (1, C)
    )


def rnn_reference(x, params):
    """Pure-JAX reference of the same forward (gate layout [i, f, o, g])."""
    w_ih, w_hh, b, w_out, b_out = params
    B, T, _ = x.shape
    h = jnp.zeros((B, HIDDEN), jnp.float32)
    c = jnp.zeros((B, HIDDEN), jnp.float32)
    for t in range(T):
        gates = x[:, t, :] @ w_ih + h @ w_hh + b
        i_g = jax.nn.sigmoid(gates[:, 0 * HIDDEN:1 * HIDDEN])
        f_g = jax.nn.sigmoid(gates[:, 1 * HIDDEN:2 * HIDDEN])
        o_g = jax.nn.sigmoid(gates[:, 2 * HIDDEN:3 * HIDDEN])
        g_g = jnp.tanh(gates[:, 3 * HIDDEN:4 * HIDDEN])
        c = f_g * c + i_g * g_g
        h = o_g * jnp.tanh(c)
    return h @ w_out + b_out


if __name__ == "__main__":
    key = jax.random.PRNGKey(0)
    kx, kp = jax.random.split(key)

    B, T = 2, 8
    x = jax.random.normal(kx, (B, T, INPUT_SIZE), dtype=jnp.float32)
    params = init_params(kp)

    ref = rnn_reference(x, params)

    # f32 operand path: exact structural check vs. the f32 reference.
    out = jax.block_until_ready(rnn_forward(x, params))
    assert out.shape == (B, NUM_CLASSES)
    assert jnp.allclose(out, ref, atol=1e-4, rtol=1e-4)

    # bf16 MXU-native path (recommended on v5e/v6e/v7x): relaxed tolerance vs. the
    # f32 reference, as bf16 operand error compounds over the 8 recurrent steps.
    out_bf16 = jax.block_until_ready(
        rnn_forward(x, params, compute_dtype=jnp.bfloat16))
    assert out_bf16.shape == (B, NUM_CLASSES)
    assert jnp.allclose(out_bf16, ref, atol=1e-1, rtol=1e-1)

    print("KERNEL_OK")
</pallas_src>

<mosaic_0001>
module attributes {stable_mosaic.version = 11 : i64} {
  func.func @lstm_linear_kernel(%arg0: i32, %arg1: memref<8x8x28xf32, #tpu.memory_space<vmem>>, %arg2: memref<28x256xf32, #tpu.memory_space<vmem>>, %arg3: memref<64x256xf32, #tpu.memory_space<vmem>>, %arg4: memref<1x256xf32, #tpu.memory_space<vmem>>, %arg5: memref<64x128xf32, #tpu.memory_space<vmem>>, %arg6: memref<1x128xf32, #tpu.memory_space<vmem>>, %arg7: memref<8x128xf32, #tpu.memory_space<vmem>>, %arg8: memref<64x256xf32, #tpu.memory_space<vmem>>) attributes {dimension_semantics = [#tpu.dimension_semantics<parallel>], iteration_bounds = array<i64: 1>, scalar_prefetch = 0 : i64, scratch_operands = 1 : i64, tpu.core_type = #tpu.core_type<tc>, window_params = [{transform_indices = @transform_0, window_bounds = array<i64: 8, 8, 28>}, {pipeline_mode = #tpu.pipeline_mode<synchronous>, transform_indices = @transform_1, window_bounds = array<i64: 28, 256>}, {pipeline_mode = #tpu.pipeline_mode<synchronous>, transform_indices = @transform_2, window_bounds = array<i64: 64, 256>}, {pipeline_mode = #tpu.pipeline_mode<synchronous>, transform_indices = @transform_3, window_bounds = array<i64: 1, 256>}, {pipeline_mode = #tpu.pipeline_mode<synchronous>, transform_indices = @transform_4, window_bounds = array<i64: 64, 128>}, {pipeline_mode = #tpu.pipeline_mode<synchronous>, transform_indices = @transform_5, window_bounds = array<i64: 1, 128>}, {transform_indices = @transform_6, window_bounds = array<i64: 8, 128>}]} {
    %c0 = arith.constant 0 : index
    %c0_0 = arith.constant 0 : index
    %c0_1 = arith.constant 0 : index
    %0 = vector.load %arg1[%c0, %c0_0, %c0_1] : memref<8x8x28xf32, #tpu.memory_space<vmem>>, vector<8x8x28xf32>
    %1 = vector.shape_cast %0 : vector<8x8x28xf32> to vector<64x28xf32>
    %c0_2 = arith.constant 0 : index
    %c0_3 = arith.constant 0 : index
    %2 = vector.load %arg2[%c0_2, %c0_3] : memref<28x256xf32, #tpu.memory_space<vmem>>, vector<28x256xf32>
    %cst = arith.constant dense<0.000000e+00> : vector<64x256xf32>
    %3 = tpu.matmul %1, %2, %cst {dimension_numbers = #tpu.dot_dimension_numbers<[1], [0], [0], [1], [0, 0, 1, 1], [], []>} : vector<64x28xf32>, vector<28x256xf32>, vector<64x256xf32> -> vector<64x256xf32>
    %c0_4 = arith.constant 0 : index
    %c0_5 = arith.constant 0 : index
    %4 = vector.load %arg4[%c0_4, %c0_5] : memref<1x256xf32, #tpu.memory_space<vmem>>, vector<1x256xf32>
    %5 = vector.broadcast %4 : vector<1x256xf32> to vector<64x256xf32>
    %6 = arith.addf %3, %5 : vector<64x256xf32>
    %c0_6 = arith.constant 0 : index
    %c0_7 = arith.constant 0 : index
    %7 = vector.load %arg8[%c0_6, %c0_7] : memref<64x256xf32, #tpu.memory_space<vmem>>, vector<64x256xf32>
    tpu.vector_store %arg8[%c0_6, %c0_7], %6 {strides = array<i32>} : memref<64x256xf32, #tpu.memory_space<vmem>>, vector<64x256xf32>,
    %c0_8 = arith.constant 0 : index
    %c0_9 = arith.constant 0 : index
    %8 = vector.load %arg3[%c0_8, %c0_9] : memref<64x256xf32, #tpu.memory_space<vmem>>, vector<64x256xf32>
    %cst_10 = arith.constant 0.000000e+00 : f32
    %9 = vector.broadcast %cst_10 : f32 to vector<8x64xf32>
    %cst_11 = arith.constant 0.000000e+00 : f32
    %10 = vector.broadcast %cst_11 : f32 to vector<8x64xf32>
    %c0_i32 = arith.constant 0 : i32
    %c8_i32 = arith.constant 8 : i32
    %11 = arith.muli %c0_i32, %c8_i32 : i32
    %12 = tpu.assume_multiple %11, 8 : i32
    %13 = arith.index_cast %12 : i32 to index
    %c0_12 = arith.constant 0 : index
    %14 = vector.load %arg8[%13, %c0_12] : memref<64x256xf32, #tpu.memory_space<vmem>>, vector<8x256xf32>
    %cst_13 = arith.constant dense<0.000000e+00> : vector<8x256xf32>
    %15 = tpu.matmul %9, %8, %cst_13 {dimension_numbers = #tpu.dot_dimension_numbers<[1], [0], [0], [1], [0, 0, 1, 1], [], []>} : vector<8x64xf32>, vector<64x256xf32>, vector<8x256xf32> -> vector<8x256xf32>
    %16 = arith.addf %14, %15 : vector<8x256xf32>
    %17 = vector.extract_strided_slice %16 {offsets = [0, 0], sizes = [8, 192], strides = [1, 1]} : vector<8x256xf32> to vector<8x192xf32>
    %18 = arith.negf %17 : vector<8x192xf32>
    %19 = math.exp %18 : vector<8x192xf32>
    %cst_14 = arith.constant 1.000000e+00 : f32
    %20 = vector.broadcast %cst_14 : f32 to vector<8x192xf32>
    %21 = arith.addf %20, %19 : vector<8x192xf32>
    %22 = arith.divf %20, %21 : vector<8x192xf32>
    %23 = vector.extract_strided_slice %16 {offsets = [0, 192], sizes = [8, 64], strides = [1, 1]} : vector<8x256xf32> to vector<8x64xf32>
    %24 = math.tanh %23 : vector<8x64xf32>
    %25 = vector.extract_strided_slice %22 {offsets = [0, 0], sizes = [8, 64], strides = [1, 1]} : vector<8x192xf32> to vector<8x64xf32>
    %26 = vector.extract_strided_slice %22 {offsets = [0, 64], sizes = [8, 64], strides = [1, 1]} : vector<8x192xf32> to vector<8x64xf32>
    %27 = vector.extract_strided_slice %22 {offsets = [0, 128], sizes = [8, 64], strides = [1, 1]} : vector<8x192xf32> to vector<8x64xf32>
    %28 = arith.mulf %26, %10 : vector<8x64xf32>
    %29 = arith.mulf %25, %24 : vector<8x64xf32>
    %30 = arith.addf %28, %29 : vector<8x64xf32>
    %31 = math.tanh %30 : vector<8x64xf32>
    %32 = arith.mulf %27, %31 : vector<8x64xf32>
    %c1_i32 = arith.constant 1 : i32
    %c8_i32_15 = arith.constant 8 : i32
    %33 = arith.muli %c1_i32, %c8_i32_15 : i32
    %34 = tpu.assume_multiple %33, 8 : i32
    %35 = arith.index_cast %34 : i32 to index
    %c0_16 = arith.constant 0 : index
    %36 = vector.load %arg8[%35, %c0_16] : memref<64x256xf32, #tpu.memory_space<vmem>>, vector<8x256xf32>
    %cst_17 = arith.constant dense<0.000000e+00> : vector<8x256xf32>
    %37 = tpu.matmul %32, %8, %cst_17 {dimension_numbers = #tpu.dot_dimension_numbers<[1], [0], [0], [1], [0, 0, 1, 1], [], []>} : vector<8x64xf32>, vector<64x256xf32>, vector<8x256xf32> -> vector<8x256xf32>
    %38 = arith.addf %36, %37 : vector<8x256xf32>
    %39 = vector.extract_strided_slice %38 {offsets = [0, 0], sizes = [8, 192], strides = [1, 1]} : vector<8x256xf32> to vector<8x192xf32>
    %40 = arith.negf %39 : vector<8x192xf32>
    %41 = math.exp %40 : vector<8x192xf32>
    %cst_18 = arith.constant 1.000000e+00 : f32
    %42 = vector.broadcast %cst_18 : f32 to vector<8x192xf32>
    %43 = arith.addf %42, %41 : vector<8x192xf32>
    %44 = arith.divf %42, %43 : vector<8x192xf32>
    %45 = vector.extract_strided_slice %38 {offsets = [0, 192], sizes = [8, 64], strides = [1, 1]} : vector<8x256xf32> to vector<8x64xf32>
    %46 = math.tanh %45 : vector<8x64xf32>
    %47 = vector.extract_strided_slice %44 {offsets = [0, 0], sizes = [8, 64], strides = [1, 1]} : vector<8x192xf32> to vector<8x64xf32>
    %48 = vector.extract_strided_slice %44 {offsets = [0, 64], sizes = [8, 64], strides = [1, 1]} : vector<8x192xf32> to vector<8x64xf32>
    %49 = vector.extract_strided_slice %44 {offsets = [0, 128], sizes = [8, 64], strides = [1, 1]} : vector<8x192xf32> to vector<8x64xf32>
    %50 = arith.mulf %48, %30 : vector<8x64xf32>
    %51 = arith.mulf %47, %46 : vector<8x64xf32>
    %52 = arith.addf %50, %51 : vector<8x64xf32>
    %53 = math.tanh %52 : vector<8x64xf32>
    %54 = arith.mulf %49, %53 : vector<8x64xf32>
    %c2_i32 = arith.constant 2 : i32
    %c8_i32_19 = arith.constant 8 : i32
    %55 = arith.muli %c2_i32, %c8_i32_19 : i32
    %56 = tpu.assume_multiple %55, 8 : i32
    %57 = arith.index_cast %56 : i32 to index
    %c0_20 = arith.constant 0 : index
    %58 = vector.load %arg8[%57, %c0_20] : memref<64x256xf32, #tpu.memory_space<vmem>>, vector<8x256xf32>
    %cst_21 = arith.constant dense<0.000000e+00> : vector<8x256xf32>
    %59 = tpu.matmul %54, %8, %cst_21 {dimension_numbers = #tpu.dot_dimension_numbers<[1], [0], [0], [1], [0, 0, 1, 1], [], []>} : vector<8x64xf32>, vector<64x256xf32>, vector<8x256xf32> -> vector<8x256xf32>
    %60 = arith.addf %58, %59 : vector<8x256xf32>
    %61 = vector.extract_strided_slice %60 {offsets = [0, 0], sizes = [8, 192], strides = [1, 1]} : vector<8x256xf32> to vector<8x192xf32>
    %62 = arith.negf %61 : vector<8x192xf32>
    %63 = math.exp %62 : vector<8x192xf32>
    %cst_22 = arith.constant 1.000000e+00 : f32
    %64 = vector.broadcast %cst_22 : f32 to vector<8x192xf32>
    %65 = arith.addf %64, %63 : vector<8x192xf32>
    %66 = arith.divf %64, %65 : vector<8x192xf32>
    %67 = vector.extract_strided_slice %60 {offsets = [0, 192], sizes = [8, 64], strides = [1, 1]} : vector<8x256xf32> to vector<8x64xf32>
    %68 = math.tanh %67 : vector<8x64xf32>
    %69 = vector.extract_strided_slice %66 {offsets = [0, 0], sizes = [8, 64], strides = [1, 1]} : vector<8x192xf32> to vector<8x64xf32>
    %70 = vector.extract_strided_slice %66 {offsets = [0, 64], sizes = [8, 64], strides = [1, 1]} : vector<8x192xf32> to vector<8x64xf32>
    %71 = vector.extract_strided_slice %66 {offsets = [0, 128], sizes = [8, 64], strides = [1, 1]} : vector<8x192xf32> to vector<8x64xf32>
    %72 = arith.mulf %70, %52 : vector<8x64xf32>
    %73 = arith.mulf %69, %68 : vector<8x64xf32>
    %74 = arith.addf %72, %73 : vector<8x64xf32>
    %75 = math.tanh %74 : vector<8x64xf32>
    %76 = arith.mulf %71, %75 : vector<8x64xf32>
    %c3_i32 = arith.constant 3 : i32
    %c8_i32_23 = arith.constant 8 : i32
    %77 = arith.muli %c3_i32, %c8_i32_23 : i32
    %78 = tpu.assume_multiple %77, 8 : i32
    %79 = arith.index_cast %78 : i32 to index
    %c0_24 = arith.constant 0 : index
    %80 = vector.load %arg8[%79, %c0_24] : memref<64x256xf32, #tpu.memory_space<vmem>>, vector<8x256xf32>
    %cst_25 = arith.constant dense<0.000000e+00> : vector<8x256xf32>
    %81 = tpu.matmul %76, %8, %cst_25 {dimension_numbers = #tpu.dot_dimension_numbers<[1], [0], [0], [1], [0, 0, 1, 1], [], []>} : vector<8x64xf32>, vector<64x256xf32>, vector<8x256xf32> -> vector<8x256xf32>
    %82 = arith.addf %80, %81 : vector<8x256xf32>
    %83 = vector.extract_strided_slice %82 {offsets = [0, 0], sizes = [8, 192], strides = [1, 1]} : vector<8x256xf32> to vector<8x192xf32>
    %84 = arith.negf %83 : vector<8x192xf32>
    %85 = math.exp %84 : vector<8x192xf32>
    %cst_26 = arith.constant 1.000000e+00 : f32
    %86 = vector.broadcast %cst_26 : f32 to vector<8x192xf32>
    %87 = arith.addf %86, %85 : vector<8x192xf32>
    %88 = arith.divf %86, %87 : vector<8x192xf32>
    %89 = vector.extract_strided_slice %82 {offsets = [0, 192], sizes = [8, 64], strides = [1, 1]} : vector<8x256xf32> to vector<8x64xf32>
    %90 = math.tanh %89 : vector<8x64xf32>
    %91 = vector.extract_strided_slice %88 {offsets = [0, 0], sizes = [8, 64], strides = [1, 1]} : vector<8x192xf32> to vector<8x64xf32>
    %92 = vector.extract_strided_slice %88 {offsets = [0, 64], sizes = [8, 64], strides = [1, 1]} : vector<8x192xf32> to vector<8x64xf32>
    %93 = vector.extract_strided_slice %88 {offsets = [0, 128], sizes = [8, 64], strides = [1, 1]} : vector<8x192xf32> to vector<8x64xf32>
    %94 = arith.mulf %92, %74 : vector<8x64xf32>
    %95 = arith.mulf %91, %90 : vector<8x64xf32>
    %96 = arith.addf %94, %95 : vector<8x64xf32>
    %97 = math.tanh %96 : vector<8x64xf32>
    %98 = arith.mulf %93, %97 : vector<8x64xf32>
    %c4_i32 = arith.constant 4 : i32
    %c8_i32_27 = arith.constant 8 : i32
    %99 = arith.muli %c4_i32, %c8_i32_27 : i32
    %100 = tpu.assume_multiple %99, 8 : i32
    %101 = arith.index_cast %100 : i32 to index
    %c0_28 = arith.constant 0 : index
    %102 = vector.load %arg8[%101, %c0_28] : memref<64x256xf32, #tpu.memory_space<vmem>>, vector<8x256xf32>
    %cst_29 = arith.constant dense<0.000000e+00> : vector<8x256xf32>
    %103 = tpu.matmul %98, %8, %cst_29 {dimension_numbers = #tpu.dot_dimension_numbers<[1], [0], [0], [1], [0, 0, 1, 1], [], []>} : vector<8x64xf32>, vector<64x256xf32>, vector<8x256xf32> -> vector<8x256xf32>
    %104 = arith.addf %102, %103 : vector<8x256xf32>
    %105 = vector.extract_strided_slice %104 {offsets = [0, 0], sizes = [8, 192], strides = [1, 1]} : vector<8x256xf32> to vector<8x192xf32>
    %106 = arith.negf %105 : vector<8x192xf32>
    %107 = math.exp %106 : vector<8x192xf32>
    %cst_30 = arith.constant 1.000000e+00 : f32
    %108 = vector.broadcast %cst_30 : f32 to vector<8x192xf32>
    %109 = arith.addf %108, %107 : vector<8x192xf32>
    %110 = arith.divf %108, %109 : vector<8x192xf32>
    %111 = vector.extract_strided_slice %104 {offsets = [0, 192], sizes = [8, 64], strides = [1, 1]} : vector<8x256xf32> to vector<8x64xf32>
    %112 = math.tanh %111 : vector<8x64xf32>
    %113 = vector.extract_strided_slice %110 {offsets = [0, 0], sizes = [8, 64], strides = [1, 1]} : vector<8x192xf32> to vector<8x64xf32>
    %114 = vector.extract_strided_slice %110 {offsets = [0, 64], sizes = [8, 64], strides = [1, 1]} : vector<8x192xf32> to vector<8x64xf32>
    %115 = vector.extract_strided_slice %110 {offsets = [0, 128], sizes = [8, 64], strides = [1, 1]} : vector<8x192xf32> to vector<8x64xf32>
    %116 = arith.mulf %114, %96 : vector<8x64xf32>
    %117 = arith.mulf %113, %112 : vector<8x64xf32>
    %118 = arith.addf %116, %117 : vector<8x64xf32>
    %119 = math.tanh %118 : vector<8x64xf32>
    %120 = arith.mulf %115, %119 : vector<8x64xf32>
    %c5_i32 = arith.constant 5 : i32
    %c8_i32_31 = arith.constant 8 : i32
    %121 = arith.muli %c5_i32, %c8_i32_31 : i32
    %122 = tpu.assume_multiple %121, 8 : i32
    %123 = arith.index_cast %122 : i32 to index
    %c0_32 = arith.constant 0 : index
    %124 = vector.load %arg8[%123, %c0_32] : memref<64x256xf32, #tpu.memory_space<vmem>>, vector<8x256xf32>
    %cst_33 = arith.constant dense<0.000000e+00> : vector<8x256xf32>
    %125 = tpu.matmul %120, %8, %cst_33 {dimension_numbers = #tpu.dot_dimension_numbers<[1], [0], [0], [1], [0, 0, 1, 1], [], []>} : vector<8x64xf32>, vector<64x256xf32>, vector<8x256xf32> -> vector<8x256xf32>
    %126 = arith.addf %124, %125 : vector<8x256xf32>
    %127 = vector.extract_strided_slice %126 {offsets = [0, 0], sizes = [8, 192], strides = [1, 1]} : vector<8x256xf32> to vector<8x192xf32>
    %128 = arith.negf %127 : vector<8x192xf32>
    %129 = math.exp %128 : vector<8x192xf32>
    %cst_34 = arith.constant 1.000000e+00 : f32
    %130 = vector.broadcast %cst_34 : f32 to vector<8x192xf32>
    %131 = arith.addf %130, %129 : vector<8x192xf32>
    %132 = arith.divf %130, %131 : vector<8x192xf32>
    %133 = vector.extract_strided_slice %126 {offsets = [0, 192], sizes = [8, 64], strides = [1, 1]} : vector<8x256xf32> to vector<8x64xf32>
    %134 = math.tanh %133 : vector<8x64xf32>
    %135 = vector.extract_strided_slice %132 {offsets = [0, 0], sizes = [8, 64], strides = [1, 1]} : vector<8x192xf32> to vector<8x64xf32>
    %136 = vector.extract_strided_slice %132 {offsets = [0, 64], sizes = [8, 64], strides = [1, 1]} : vector<8x192xf32> to vector<8x64xf32>
    %137 = vector.extract_strided_slice %132 {offsets = [0, 128], sizes = [8, 64], strides = [1, 1]} : vector<8x192xf32> to vector<8x64xf32>
    %138 = arith.mulf %136, %118 : vector<8x64xf32>
    %139 = arith.mulf %135, %134 : vector<8x64xf32>
    %140 = arith.addf %138, %139 : vector<8x64xf32>
    %141 = math.tanh %140 : vector<8x64xf32>
    %142 = arith.mulf %137, %141 : vector<8x64xf32>
    %c6_i32 = arith.constant 6 : i32
    %c8_i32_35 = arith.constant 8 : i32
    %143 = arith.muli %c6_i32, %c8_i32_35 : i32
    %144 = tpu.assume_multiple %143, 8 : i32
    %145 = arith.index_cast %144 : i32 to index
    %c0_36 = arith.constant 0 : index
    %146 = vector.load %arg8[%145, %c0_36] : memref<64x256xf32, #tpu.memory_space<vmem>>, vector<8x256xf32>
    %cst_37 = arith.constant dense<0.000000e+00> : vector<8x256xf32>
    %147 = tpu.matmul %142, %8, %cst_37 {dimension_numbers = #tpu.dot_dimension_numbers<[1], [0], [0], [1], [0, 0, 1, 1], [], []>} : vector<8x64xf32>, vector<64x256xf32>, vector<8x256xf32> -> vector<8x256xf32>
    %148 = arith.addf %146, %147 : vector<8x256xf32>
    %149 = vector.extract_strided_slice %148 {offsets = [0, 0], sizes = [8, 192], strides = [1, 1]} : vector<8x256xf32> to vector<8x192xf32>
    %150 = arith.negf %149 : vector<8x192xf32>
    %151 = math.exp %150 : vector<8x192xf32>
    %cst_38 = arith.constant 1.000000e+00 : f32
    %152 = vector.broadcast %cst_38 : f32 to vector<8x192xf32>
    %153 = arith.addf %152, %151 : vector<8x192xf32>
    %154 = arith.divf %152, %153 : vector<8x192xf32>
    %155 = vector.extract_strided_slice %148 {offsets = [0, 192], sizes = [8, 64], strides = [1, 1]} : vector<8x256xf32> to vector<8x64xf32>
    %156 = math.tanh %155 : vector<8x64xf32>
    %157 = vector.extract_strided_slice %154 {offsets = [0, 0], sizes = [8, 64], strides = [1, 1]} : vector<8x192xf32> to vector<8x64xf32>
    %158 = vector.extract_strided_slice %154 {offsets = [0, 64], sizes = [8, 64], strides = [1, 1]} : vector<8x192xf32> to vector<8x64xf32>
    %159 = vector.extract_strided_slice %154 {offsets = [0, 128], sizes = [8, 64], strides = [1, 1]} : vector<8x192xf32> to vector<8x64xf32>
    %160 = arith.mulf %158, %140 : vector<8x64xf32>
    %161 = arith.mulf %157, %156 : vector<8x64xf32>
    %162 = arith.addf %160, %161 : vector<8x64xf32>
    %163 = math.tanh %162 : vector<8x64xf32>
    %164 = arith.mulf %159, %163 : vector<8x64xf32>
    %c7_i32 = arith.constant 7 : i32
    %c8_i32_39 = arith.constant 8 : i32
    %165 = arith.muli %c7_i32, %c8_i32_39 : i32
    %166 = tpu.assume_multiple %165, 8 : i32
    %167 = arith.index_cast %166 : i32 to index
    %c0_40 = arith.constant 0 : index
    %168 = vector.load %arg8[%167, %c0_40] : memref<64x256xf32, #tpu.memory_space<vmem>>, vector<8x256xf32>
    %cst_41 = arith.constant dense<0.000000e+00> : vector<8x256xf32>
    %169 = tpu.matmul %164, %8, %cst_41 {dimension_numbers = #tpu.dot_dimension_numbers<[1], [0], [0], [1], [0, 0, 1, 1], [], []>} : vector<8x64xf32>, vector<64x256xf32>, vector<8x256xf32> -> vector<8x256xf32>
    %170 = arith.addf %168, %169 : vector<8x256xf32>
    %171 = vector.extract_strided_slice %170 {offsets = [0, 0], sizes = [8, 192], strides = [1, 1]} : vector<8x256xf32> to vector<8x192xf32>
    %172 = arith.negf %171 : vector<8x192xf32>
    %173 = math.exp %172 : vector<8x192xf32>
    %cst_42 = arith.constant 1.000000e+00 : f32
    %174 = vector.broadcast %cst_42 : f32 to vector<8x192xf32>
    %175 = arith.addf %174, %173 : vector<8x192xf32>
    %176 = arith.divf %174, %175 : vector<8x192xf32>
    %177 = vector.extract_strided_slice %170 {offsets = [0, 192], sizes = [8, 64], strides = [1, 1]} : vector<8x256xf32> to vector<8x64xf32>
    %178 = math.tanh %177 : vector<8x64xf32>
    %179 = vector.extract_strided_slice %176 {offsets = [0, 0], sizes = [8, 64], strides = [1, 1]} : vector<8x192xf32> to vector<8x64xf32>
    %180 = vector.extract_strided_slice %176 {offsets = [0, 64], sizes = [8, 64], strides = [1, 1]} : vector<8x192xf32> to vector<8x64xf32>
    %181 = vector.extract_strided_slice %176 {offsets = [0, 128], sizes = [8, 64], strides = [1, 1]} : vector<8x192xf32> to vector<8x64xf32>
    %182 = arith.mulf %180, %162 : vector<8x64xf32>
    %183 = arith.mulf %179, %178 : vector<8x64xf32>
    %184 = arith.addf %182, %183 : vector<8x64xf32>
    %185 = math.tanh %184 : vector<8x64xf32>
    %186 = arith.mulf %181, %185 : vector<8x64xf32>
    %c8_i32_43 = arith.constant 8 : i32
    %c0_44 = arith.constant 0 : index
    %c0_45 = arith.constant 0 : index
    %187 = vector.load %arg5[%c0_44, %c0_45] : memref<64x128xf32, #tpu.memory_space<vmem>>, vector<64x128xf32>
    %cst_46 = arith.constant dense<0.000000e+00> : vector<8x128xf32>
    %188 = tpu.matmul %186, %187, %cst_46 {dimension_numbers = #tpu.dot_dimension_numbers<[1], [0], [0], [1], [0, 0, 1, 1], [], []>} : vector<8x64xf32>, vector<64x128xf32>, vector<8x128xf32> -> vector<8x128xf32>
    %c0_47 = arith.constant 0 : index
    %c0_48 = arith.constant 0 : index
    %189 = vector.load %arg6[%c0_47, %c0_48] : memref<1x128xf32, #tpu.memory_space<vmem>>, vector<1x128xf32>
    %190 = vector.broadcast %189 : vector<1x128xf32> to vector<8x128xf32>
    %191 = arith.addf %188, %190 : vector<8x128xf32>
    %c0_49 = arith.constant 0 : index
    %c0_50 = arith.constant 0 : index
    %192 = vector.load %arg7[%c0_49, %c0_50] : memref<8x128xf32, #tpu.memory_space<vmem>>, vector<8x128xf32>
    tpu.vector_store %arg7[%c0_49, %c0_50], %191 {strides = array<i32>} : memref<8x128xf32, #tpu.memory_space<vmem>>, vector<8x128xf32>,
    return
  }
  func.func @transform_0(%arg0: i32) -> (i32, i32, i32) {
    %c0_i32 = arith.constant 0 : i32
    %c0_i32_0 = arith.constant 0 : i32
    %c0_i32_1 = arith.constant 0 : i32
    return %c0_i32, %arg0, %c0_i32_0 : i32, i32, i32
  }
  func.func @transform_1(%arg0: i32) -> (i32, i32) {
    %c0_i32 = arith.constant 0 : i32
    %c0_i32_0 = arith.constant 0 : i32
    %c0_i32_1 = arith.constant 0 : i32
    return %c0_i32, %c0_i32_0 : i32, i32
  }
  func.func @transform_2(%arg0: i32) -> (i32, i32) {
    %c0_i32 = arith.constant 0 : i32
    %c0_i32_0 = arith.constant 0 : i32
    %c0_i32_1 = arith.constant 0 : i32
    return %c0_i32, %c0_i32_0 : i32, i32
  }
  func.func @transform_3(%arg0: i32) -> (i32, i32) {
    %c0_i32 = arith.constant 0 : i32
    %c0_i32_0 = arith.constant 0 : i32
    %c0_i32_1 = arith.constant 0 : i32
    return %c0_i32, %c0_i32_0 : i32, i32
  }
  func.func @transform_4(%arg0: i32) -> (i32, i32) {
    %c0_i32 = arith.constant 0 : i32
    %c0_i32_0 = arith.constant 0 : i32
    %c0_i32_1 = arith.constant 0 : i32
    return %c0_i32, %c0_i32_0 : i32, i32
  }
  func.func @transform_5(%arg0: i32) -> (i32, i32) {
    %c0_i32 = arith.constant 0 : i32
    %c0_i32_0 = arith.constant 0 : i32
    %c0_i32_1 = arith.constant 0 : i32
    return %c0_i32, %c0_i32_0 : i32, i32
  }
  func.func @transform_6(%arg0: i32) -> (i32, i32) {
    %c0_i32 = arith.constant 0 : i32
    %c0_i32_0 = arith.constant 0 : i32
    return %arg0, %c0_i32 : i32, i32
  }
}

</mosaic_0001>

<llo_original>
// kernel: tpu_custom_call.1
$region0: #{tpu_custom_call.1}
  #allocation0 [shape = 'u32[]', space=smem, size = 0x4, offset = 0x4, fixed_abs, tag = 'smem constant byte address 0x4 - core index']
  #allocation1 [shape = 'u32[72,128]{1,0:T(1,128)}', space=vmem, size = 0x9000, scoped, tag = 'internal scratch']
  #allocation2 [shape = 'f32[64,256]{1,0:T(8,128)}', space=vmem, size = 0x10000, scoped, tag = 'scratch operand']
  %s0 = inlined_call_operand.hbm [shape: f32[8,8,28], index: 0, kind: input, shape index: {}]
  %s1 = inlined_call_operand.hbm [shape: f32[28,256], index: 1, kind: input, shape index: {}]
  %s2 = inlined_call_operand.hbm [shape: f32[64,256], index: 2, kind: input, shape index: {}]
  %s3 = inlined_call_operand.vmem [shape: f32[1,256], index: 3, kind: input, shape index: {}]
  %s4 = inlined_call_operand.hbm [shape: f32[64,128], index: 4, kind: input, shape index: {}]
  %s5 = inlined_call_operand.vmem [shape: f32[1,128], index: 5, kind: input, shape index: {}]
  %s6 = inlined_call_operand.hbm [shape: f32[8,128], index: 6, kind: output, shape index: {}]
  %s7 = sld [smem:[#allocation0]]
  $region50: #{tpu_custom_call.1} parent=0
    _
  %s9 = ssub.s32 1, %s7
  %s10 = scalar_select 0, %s9, %s7
  $region1: #{tpu_custom_call.1} parent=0
    #allocation3 [shape = 'u8[32768]{0}', space=vmem, size = 0x8000, scoped, tag = 'input window, operand 0, single buffered']
    #allocation4 [shape = 's32[1]{0}', space=sflag, size = 0x4, scoped, tag = 'scoped memory for tpu_custom_call.1']
    #allocation5 [shape = 's32[1]{0}', space=sflag, size = 0x4, scoped, tag = 'scoped memory for tpu_custom_call.1']
    #allocation6 [shape = 'u8[32768]{0}', space=vmem, size = 0x8000, scoped, tag = 'input window, operand 1, single buffered']
    #allocation7 [shape = 's32[1]{0}', space=sflag, size = 0x4, scoped, tag = 'scoped memory for tpu_custom_call.1']
    #allocation8 [shape = 'u8[65536]{0}', space=vmem, size = 0x10000, scoped, tag = 'input window, operand 2, single buffered']
    #allocation9 [shape = 'u8[32768]{0}', space=vmem, size = 0x8000, scoped, tag = 'input window, operand 4, single buffered']
    #allocation10 [shape = 's32[1]{0}', space=sflag, size = 0x4, scoped, tag = 'scoped memory for tpu_custom_call.1']
    #allocation11 [shape = 'u8[4096]{0}', space=vmem, size = 0x1000, scoped, tag = 'output window, operand 0, single buffered']
    %11 = vsyncpa [#allocation4], 0
    %12 = vsyncpa [#allocation7], 0
    %13 = vsyncpa [#allocation10], 0
    %14 = vsyncpa [#allocation5], 0
    // Predicated region
    $region2: #{tpu_custom_call.1} parent=1 // pred_check
      _
    $region3: #{tpu_custom_call.1} parent=1 // pred_check_branch
      %16 = sbr.rel (0) target = $region5
    $region4: #{tpu_custom_call.1} parent=1 // pred_region
      %18 = vsyncadd [#allocation4], 0
      %s19 = sshll.u32 %s0, 4
      %s20 = int_to_ptr.hbm [resolvable:$true] %s19
      %s21 = sshll.u32 [#allocation3], 4
      %s22 = int_to_ptr.vmem [resolvable:$true] %s21
      %27 = dma.hbm_to_vmem [thread:$0]  %s20, 1024, %s22, [#allocation4], 128, 128, 8
    $region5: #{tpu_custom_call.1} parent=1 // pred_fallthru
      _
    // Predicated region
    $region6: #{tpu_custom_call.1} parent=1 // pred_check
      _
    $region7: #{tpu_custom_call.1} parent=1 // pred_check_branch
      %29 = sbr.rel (0) target = $region9
    $region8: #{tpu_custom_call.1} parent=1 // pred_region
      %31 = vsyncadd [#allocation7], 0
      %s32 = sshll.u32 %s1, 4
      %s33 = int_to_ptr.hbm [resolvable:$true] %s32
      %s34 = sshll.u32 [#allocation6], 4
      %s35 = int_to_ptr.vmem [resolvable:$true] %s34
      %40 = dma.hbm_to_vmem [thread:$0]  %s33, 1024, %s35, [#allocation7], 256, 256, 16
    $region9: #{tpu_custom_call.1} parent=1 // pred_fallthru
      _
    // Predicated region
    $region10: #{tpu_custom_call.1} parent=1 // pred_check
      _
    $region11: #{tpu_custom_call.1} parent=1 // pred_check_branch
      %42 = sbr.rel (0) target = $region13
    $region12: #{tpu_custom_call.1} parent=1 // pred_region
      %44 = vsyncadd [#allocation7], 0
      %s45 = sshll.u32 %s2, 4
      %s46 = int_to_ptr.hbm [resolvable:$true] %s45
      %s47 = sshll.u32 [#allocation8], 4
      %s48 = int_to_ptr.vmem [resolvable:$true] %s47
      %53 = dma.hbm_to_vmem [thread:$0]  %s46, 2048, %s48, [#allocation7], 256, 256, 16
    $region13: #{tpu_custom_call.1} parent=1 // pred_fallthru
      _
    // Predicated region
    $region14: #{tpu_custom_call.1} parent=1 // pred_check
      _
    $region15: #{tpu_custom_call.1} parent=1 // pred_check_branch
      %55 = sbr.rel (0) target = $region17
    $region16: #{tpu_custom_call.1} parent=1 // pred_region
      _
    $region17: #{tpu_custom_call.1} parent=1 // pred_fallthru
      _
    // Predicated region
    $region18: #{tpu_custom_call.1} parent=1 // pred_check
      _
    $region19: #{tpu_custom_call.1} parent=1 // pred_check_branch
      %57 = sbr.rel (0) target = $region21
    $region20: #{tpu_custom_call.1} parent=1 // pred_region
      %59 = vsyncadd [#allocation10], 0
      %s60 = sshll.u32 %s4, 4
      %s61 = int_to_ptr.hbm [resolvable:$true] %s60
      %s62 = sshll.u32 [#allocation9], 4
      %s63 = int_to_ptr.vmem [resolvable:$true] %s62
      %68 = dma.hbm_to_vmem [thread:$0]  %s61, 1024, %s63, [#allocation10], 128, 128, 8
    $region21: #{tpu_custom_call.1} parent=1 // pred_fallthru
      _
    // Predicated region
    $region22: #{tpu_custom_call.1} parent=1 // pred_check
      _
    $region23: #{tpu_custom_call.1} parent=1 // pred_check_branch
      %70 = sbr.rel (0) target = $region25
    $region24: #{tpu_custom_call.1} parent=1 // pred_region
      _
    $region25: #{tpu_custom_call.1} parent=1 // pred_fallthru
      _
    // Predicated region
    $region26: #{tpu_custom_call.1} parent=1 // pred_check
      _
    $region27: #{tpu_custom_call.1} parent=1 // pred_check_branch
      %72 = sbr.rel (0) target = $region29
    $region28: #{tpu_custom_call.1} parent=1 // pred_region
      %74 = dma.done [#allocation4], 1024
    $region29: #{tpu_custom_call.1} parent=1 // pred_fallthru
      _
    // Predicated region
    $region30: #{tpu_custom_call.1} parent=1 // pred_check
      _
    $region31: #{tpu_custom_call.1} parent=1 // pred_check_branch
      %76 = sbr.rel (0) target = $region33
    $region32: #{tpu_custom_call.1} parent=1 // pred_region
      %78 = dma.done [#allocation7], 1024
    $region33: #{tpu_custom_call.1} parent=1 // pred_fallthru
      _
    // Predicated region
    $region34: #{tpu_custom_call.1} parent=1 // pred_check
      _
    $region35: #{tpu_custom_call.1} parent=1 // pred_check_branch
      %80 = sbr.rel (0) target = $region37
    $region36: #{tpu_custom_call.1} parent=1 // pred_region
      %82 = dma.done [#allocation7], 2048
    $region37: #{tpu_custom_call.1} parent=1 // pred_fallthru
      _
    // Predicated region
    $region38: #{tpu_custom_call.1} parent=1 // pred_check
      _
    $region39: #{tpu_custom_call.1} parent=1 // pred_check_branch
      %84 = sbr.rel (0) target = $region41
    $region40: #{tpu_custom_call.1} parent=1 // pred_region
      %86 = dma.done [#allocation10], 1024
    $region41: #{tpu_custom_call.1} parent=1 // pred_fallthru
      _
    %v87 = vld [vmem:[#allocation3] sm:$0xff]
    %v88 = vld [vmem:[#allocation3 + $0x8] sm:$0xff]
    %v89 = vld [vmem:[#allocation3 + $0x10] sm:$0xff]
    %v90 = vld [vmem:[#allocation3 + $0x18] sm:$0xff]
    %v91 = vld [vmem:[#allocation3 + $0x20] sm:$0xff]
    %v92 = vld [vmem:[#allocation3 + $0x28] sm:$0xff]
    %v93 = vld [vmem:[#allocation3 + $0x30] sm:$0xff]
    %v94 = vld [vmem:[#allocation3 + $0x38] sm:$0xff]
    %v95 = vld [vmem:[#allocation6] sm:$0xff]
    %v96 = vld [vmem:[#allocation6 + $0x8] sm:$0xff]
    %v97 = vld [vmem:[#allocation6 + $0x10] sm:$0xff]
    %v98 = vld [vmem:[#allocation6 + $0x18] sm:$0xff]
    %v99 = vld [vmem:[#allocation6 + $0x20] sm:$0xff]
    %v100 = vld [vmem:[#allocation6 + $0x28] sm:$0xff]
    %v101 = vld [vmem:[#allocation6 + $0x30] sm:$0xf]
    %v102 = vld [vmem:[#allocation6 + $0x38] sm:$0xf]
    %v103 = vld [vmem:[%s3] sm:$0x3]
    %v105 = vperm.slane %v103, 0
    %v106 = vperm.slane %v103, 1
    %vm109 = vcmask 228352
    %v111 = vsel %vm109, %v87, 0
    %v114 = vsel %vm109, %v88, 0
    %v117 = vsel %vm109, %v89, 0
    %v120 = vsel %vm109, %v90, 0
    %v123 = vsel %vm109, %v91, 0
    %v126 = vsel %vm109, %v92, 0
    %v129 = vsel %vm109, %v93, 0
    %v132 = vsel %vm109, %v94, 0
    %vm134 = vcmask 1043456
    %v136 = vsel %vm134, %v101, 0
    %v139 = vsel %vm134, %v102, 0
    %141 = vmatpush.msra.mxu0 0.0
    %142 = vmatpush.msra.mxu0 0.0
    %143 = vmatpush.msra.mxu0 0.0
    %144 = vmatpush.msra.mxu0 0.0
    %145 = vmatpush.msra.mxu0 0.0
    %146 = vmatpush.msra.mxu0 0.0
    %147 = vmatpush.msra.mxu0 0.0
    %148 = vmatpush.msra.mxu0 0.0
    %149 = vmatpush.msra.mxu0 0.0
    %150 = vmatpush.msra.mxu0 0.0
    %151 = vmatpush.msra.mxu0 0.0
    %152 = vmatpush.msra.mxu0 0.0
    %153 = vmatpush.msra.mxu0 %v136
    %154 = vmatpush.msra.mxu0 %v99
    %155 = vmatpush.msra.mxu0 %v97
    %156 = vmatpush.msra.mxu0 %v95
    %157 = vmatmul.f32.gmra.mxu0 %v111
    %v158 = vpop.f32.mrf.mxu0
    %v159 = vadd.f32 %v105, %v158
    %160 = vmatmul.f32.gmra.mxu0 %v114
    %v161 = vpop.f32.mrf.mxu0
    %v162 = vadd.f32 %v105, %v161
    %163 = vmatmul.f32.gmra.mxu0 %v117
    %v164 = vpop.f32.mrf.mxu0
    %v165 = vadd.f32 %v105, %v164
    %166 = vmatmul.f32.gmra.mxu0 %v120
    %v167 = vpop.f32.mrf.mxu0
    %v168 = vadd.f32 %v105, %v167
    %169 = vmatmul.f32.gmra.mxu0 %v123
    %v170 = vpop.f32.mrf.mxu0
    %v171 = vadd.f32 %v105, %v170
    %172 = vmatmul.f32.gmra.mxu0 %v126
    %v173 = vpop.f32.mrf.mxu0
    %v174 = vadd.f32 %v105, %v173
    %175 = vmatmul.f32.gmra.mxu0 %v129
    %v176 = vpop.f32.mrf.mxu0
    %v177 = vadd.f32 %v105, %v176
    %178 = vmatmul.f32.gmra.mxu0 %v132
    %v179 = vpop.f32.mrf.mxu0
    %v180 = vadd.f32 %v105, %v179
    %181 = vdwg.mxu0
    %182 = vmatpush.msra.mxu0 0.0
    %183 = vmatpush.msra.mxu0 0.0
    %184 = vmatpush.msra.mxu0 0.0
    %185 = vmatpush.msra.mxu0 0.0
    %186 = vmatpush.msra.mxu0 0.0
    %187 = vmatpush.msra.mxu0 0.0
    %188 = vmatpush.msra.mxu0 0.0
    %189 = vmatpush.msra.mxu0 0.0
    %190 = vmatpush.msra.mxu0 0.0
    %191 = vmatpush.msra.mxu0 0.0
    %192 = vmatpush.msra.mxu0 0.0
    %193 = vmatpush.msra.mxu0 0.0
    %194 = vmatpush.msra.mxu0 %v139
    %195 = vmatpush.msra.mxu0 %v100
    %196 = vmatpush.msra.mxu0 %v98
    %197 = vmatpush.msra.mxu0 %v96
    %198 = vmatmul.f32.gmra.mxu0 %v111
    %v199 = vpop.f32.mrf.mxu0
    %v200 = vadd.f32 %v106, %v199
    %201 = vmatmul.f32.gmra.mxu0 %v114
    %v202 = vpop.f32.mrf.mxu0
    %v203 = vadd.f32 %v106, %v202
    %204 = vmatmul.f32.gmra.mxu0 %v117
    %v205 = vpop.f32.mrf.mxu0
    %v206 = vadd.f32 %v106, %v205
    %207 = vmatmul.f32.gmra.mxu0 %v120
    %v208 = vpop.f32.mrf.mxu0
    %v209 = vadd.f32 %v106, %v208
    %210 = vmatmul.f32.gmra.mxu0 %v123
    %v211 = vpop.f32.mrf.mxu0
    %v212 = vadd.f32 %v106, %v211
    %213 = vmatmul.f32.gmra.mxu0 %v126
    %v214 = vpop.f32.mrf.mxu0
    %v215 = vadd.f32 %v106, %v214
    %216 = vmatmul.f32.gmra.mxu0 %v129
    %v217 = vpop.f32.mrf.mxu0
    %v218 = vadd.f32 %v106, %v217
    %219 = vmatmul.f32.gmra.mxu0 %v132
    %v220 = vpop.f32.mrf.mxu0
    %v221 = vadd.f32 %v106, %v220
    %222 = vdwg.mxu0
    %223 = vst [vmem:[#allocation2] sm:$0xff] %v159
    %224 = vst [vmem:[#allocation2 + $0x8] sm:$0xff] %v200
    %225 = vst [vmem:[#allocation2 + $0x10] sm:$0xff] %v162
    %226 = vst [vmem:[#allocation2 + $0x18] sm:$0xff] %v203
    %227 = vst [vmem:[#allocation2 + $0x20] sm:$0xff] %v165
    %228 = vst [vmem:[#allocation2 + $0x28] sm:$0xff] %v206
    %229 = vst [vmem:[#allocation2 + $0x30] sm:$0xff] %v168
    %230 = vst [vmem:[#allocation2 + $0x38] sm:$0xff] %v209
    %231 = vst [vmem:[#allocation2 + $0x40] sm:$0xff] %v171
    %232 = vst [vmem:[#allocation2 + $0x48] sm:$0xff] %v212
    %233 = vst [vmem:[#allocation2 + $0x50] sm:$0xff] %v174
    %234 = vst [vmem:[#allocation2 + $0x58] sm:$0xff] %v215
    %235 = vst [vmem:[#allocation2 + $0x60] sm:$0xff] %v177
    %236 = vst [vmem:[#allocation2 + $0x68] sm:$0xff] %v218
    %237 = vst [vmem:[#allocation2 + $0x70] sm:$0xff] %v180
    %238 = vst [vmem:[#allocation2 + $0x78] sm:$0xff] %v221
    %v239 = vld [vmem:[#allocation8] sm:$0xff]
    %v240 = vld [vmem:[#allocation8 + $0x8] sm:$0xff]
    %v241 = vld [vmem:[#allocation8 + $0x10] sm:$0xff]
    %v242 = vld [vmem:[#allocation8 + $0x18] sm:$0xff]
    %v243 = vld [vmem:[#allocation8 + $0x20] sm:$0xff]
    %v244 = vld [vmem:[#allocation8 + $0x28] sm:$0xff]
    %v245 = vld [vmem:[#allocation8 + $0x30] sm:$0xff]
    %v246 = vld [vmem:[#allocation8 + $0x38] sm:$0xff]
    %v247 = vld [vmem:[#allocation8 + $0x40] sm:$0xff]
    %v248 = vld [vmem:[#allocation8 + $0x48] sm:$0xff]
    %v249 = vld [vmem:[#allocation8 + $0x50] sm:$0xff]
    %v250 = vld [vmem:[#allocation8 + $0x58] sm:$0xff]
    %v251 = vld [vmem:[#allocation8 + $0x60] sm:$0xff]
    %v252 = vld [vmem:[#allocation8 + $0x68] sm:$0xff]
    %v253 = vld [vmem:[#allocation8 + $0x70] sm:$0xff]
    %v254 = vld [vmem:[#allocation8 + $0x78] sm:$0xff]
    %s255 = smul.u32 0, 2
    %s256 = smul.addr %s255, 8
    %s257 = scalar_lea.vmem [#allocation2], %s256
    %v258 = vld [vmem:[%s257] sm:$0xff]
    %v259 = vld [vmem:[%s257 + $0x8] sm:$0xff]
    %vm260 = vcmask 523264
    %v262 = vsel %vm260, 0.0, 0
    %264 = vmatpush.msra.mxu0 0.0
    %265 = vmatpush.msra.mxu0 0.0
    %266 = vmatpush.msra.mxu0 0.0
    %267 = vmatpush.msra.mxu0 0.0
    %268 = vmatpush.msra.mxu0 0.0
    %269 = vmatpush.msra.mxu0 0.0
    %270 = vmatpush.msra.mxu0 0.0
    %271 = vmatpush.msra.mxu0 0.0
    %272 = vmatpush.msra.mxu0 %v253
    %273 = vmatpush.msra.mxu0 %v251
    %274 = vmatpush.msra.mxu0 %v249
    %275 = vmatpush.msra.mxu0 %v247
    %276 = vmatpush.msra.mxu0 %v245
    %277 = vmatpush.msra.mxu0 %v243
    %278 = vmatpush.msra.mxu0 %v241
    %279 = vmatpush.msra.mxu0 %v239
    %280 = vmatmul.f32.gmra.mxu0 %v262
    %v281 = vpop.f32.mrf.mxu0
    %v282 = vadd.f32 0.0, %v281
    %283 = vdwg.mxu0
    %284 = vmatpush.msra.mxu0 0.0
    %285 = vmatpush.msra.mxu0 0.0
    %286 = vmatpush.msra.mxu0 0.0
    %287 = vmatpush.msra.mxu0 0.0
    %288 = vmatpush.msra.mxu0 0.0
    %289 = vmatpush.msra.mxu0 0.0
    %290 = vmatpush.msra.mxu0 0.0
    %291 = vmatpush.msra.mxu0 0.0
    %292 = vmatpush.msra.mxu0 %v254
    %293 = vmatpush.msra.mxu0 %v252
    %294 = vmatpush.msra.mxu0 %v250
    %295 = vmatpush.msra.mxu0 %v248
    %296 = vmatpush.msra.mxu0 %v246
    %297 = vmatpush.msra.mxu0 %v244
    %298 = vmatpush.msra.mxu0 %v242
    %299 = vmatpush.msra.mxu0 %v240
    %300 = vmatmul.f32.gmra.mxu0 %v262
    %v301 = vpop.f32.mrf.mxu0
    %v302 = vadd.f32 0.0, %v301
    %303 = vdwg.mxu0
    %v304 = vadd.f32 %v258, %v282
    %v305 = vadd.f32 %v259, %v302
    %v306 = vxor.u32 %v304, 2147483648
    %v307 = vxor.u32 %v305, 2147483648
    %v308 = vmul.f32 %v306, 1.442695
    %v309 = vpow.pop %v308
    %v310 = vmul.f32 %v307, 1.442695
    %v311 = vpow.pop %v310
    %v312 = vadd.f32 %v309, 1.0
    %v313 = vadd.f32 %v311, 1.0
    %v314 = vrcp.pop %v312
    %v315 = vmul.f32 %v312, %v314
    %v316 = vsub.f32 1.0, %v315
    %v317 = vmul.f32 %v314, %v316
    %v318 = vadd.f32 %v314, %v317
    %vm319 = vweird.f32 %v312
    %vm320 = vweird.f32 %v314
    %vm321 = vmor %vm319, %vm320
    %v322 = vsel %vm321, %v314, %v318
    %v323 = vand.u32 2147483647, %v312
    %vm324 = vcmp.eq.f32.partialorder %v323, 8.507059e+37
    %v325 = vand.u32 %v312, 2147483648
    %v326 = vor.u32 1.1754944e-38, %v325
    %v327 = vsel %vm324, %v326, %v322
    %v328 = vmul.f32 1.0, %v327
    %v329 = vrcp.pop %v313
    %v330 = vmul.f32 %v313, %v329
    %v331 = vsub.f32 1.0, %v330
    %v332 = vmul.f32 %v329, %v331
    %v333 = vadd.f32 %v329, %v332
    %vm334 = vweird.f32 %v313
    %vm335 = vweird.f32 %v329
    %vm336 = vmor %vm334, %vm335
    %v337 = vsel %vm336, %v329, %v333
    %v338 = vand.u32 2147483647, %v313
    %vm339 = vcmp.eq.f32.partialorder %v338, 8.507059e+37
    %v340 = vand.u32 %v313, 2147483648
    %v341 = vor.u32 1.1754944e-38, %v340
    %v342 = vsel %vm339, %v341, %v337
    %v343 = vmul.f32 1.0, %v342
    %v344 = vtanh.pop %v305
    %v345 = vmul.f32 %v328, 0.0
    %347 = vrot.lane.b32.xlu0 %v344, 64
    %v348 = vpop.permute.xlu0 %347
    %v350 = vmul.f32 %v328, %v348
    %352 = vrot.lane.b32.xlu0 %v350, 64
    %v353 = vpop.permute.xlu0 %352
    %v355 = vadd.f32 %v345, %v353
    %v356 = vtanh.pop %v355
    %358 = vrot.lane.b32.xlu0 %v356, 64
    %v359 = vpop.permute.xlu0 %358
    %v361 = vmul.f32 %v343, %v359
    %s362 = smul.u32 1, 2
    %s363 = smul.addr %s362, 8
    %s364 = scalar_lea.vmem [#allocation2], %s363
    %v365 = vld [vmem:[%s364] sm:$0xff]
    %v366 = vld [vmem:[%s364 + $0x8] sm:$0xff]
    %v368 = vsel %vm260, %v361, 0
    %370 = vmatpush.msra.mxu0 0.0
    %371 = vmatpush.msra.mxu0 0.0
    %372 = vmatpush.msra.mxu0 0.0
    %373 = vmatpush.msra.mxu0 0.0
    %374 = vmatpush.msra.mxu0 0.0
    %375 = vmatpush.msra.mxu0 0.0
    %376 = vmatpush.msra.mxu0 0.0
    %377 = vmatpush.msra.mxu0 0.0
    %378 = vmatpush.msra.mxu0 %v253
    %379 = vmatpush.msra.mxu0 %v251
    %380 = vmatpush.msra.mxu0 %v249
    %381 = vmatpush.msra.mxu0 %v247
    %382 = vmatpush.msra.mxu0 %v245
    %383 = vmatpush.msra.mxu0 %v243
    %384 = vmatpush.msra.mxu0 %v241
    %385 = vmatpush.msra.mxu0 %v239
    %386 = vmatmul.f32.gmra.mxu0 %v368
    %v387 = vpop.f32.mrf.mxu0
    %v388 = vadd.f32 0.0, %v387
    %389 = vdwg.mxu0
    %390 = vmatpush.msra.mxu0 0.0
    %391 = vmatpush.msra.mxu0 0.0
    %392 = vmatpush.msra.mxu0 0.0
    %393 = vmatpush.msra.mxu0 0.0
    %394 = vmatpush.msra.mxu0 0.0
    %395 = vmatpush.msra.mxu0 0.0
    %396 = vmatpush.msra.mxu0 0.0
    %397 = vmatpush.msra.mxu0 0.0
    %398 = vmatpush.msra.mxu0 %v254
    %399 = vmatpush.msra.mxu0 %v252
    %400 = vmatpush.msra.mxu0 %v250
    %401 = vmatpush.msra.mxu0 %v248
    %402 = vmatpush.msra.mxu0 %v246
    %403 = vmatpush.msra.mxu0 %v244
    %404 = vmatpush.msra.mxu0 %v242
    %405 = vmatpush.msra.mxu0 %v240
    %406 = vmatmul.f32.gmra.mxu0 %v368
    %v407 = vpop.f32.mrf.mxu0
    %v408 = vadd.f32 0.0, %v407
    %409 = vdwg.mxu0
    %v410 = vadd.f32 %v365, %v388
    %v411 = vadd.f32 %v366, %v408
    %v412 = vxor.u32 %v410, 2147483648
    %v413 = vxor.u32 %v411, 2147483648
    %v414 = vmul.f32 %v412, 1.442695
    %v415 = vpow.pop %v414
    %v416 = vmul.f32 %v413, 1.442695
    %v417 = vpow.pop %v416
    %v418 = vadd.f32 %v415, 1.0
    %v419 = vadd.f32 %v417, 1.0
    %v420 = vrcp.pop %v418
    %v421 = vmul.f32 %v418, %v420
    %v422 = vsub.f32 1.0, %v421
    %v423 = vmul.f32 %v420, %v422
    %v424 = vadd.f32 %v420, %v423
    %vm425 = vweird.f32 %v418
    %vm426 = vweird.f32 %v420
    %vm427 = vmor %vm425, %vm426
    %v428 = vsel %vm427, %v420, %v424
    %v429 = vand.u32 2147483647, %v418
    %vm430 = vcmp.eq.f32.partialorder %v429, 8.507059e+37
    %v431 = vand.u32 %v418, 2147483648
    %v432 = vor.u32 1.1754944e-38, %v431
    %v433 = vsel %vm430, %v432, %v428
    %v434 = vmul.f32 1.0, %v433
    %v435 = vrcp.pop %v419
    %v436 = vmul.f32 %v419, %v435
    %v437 = vsub.f32 1.0, %v436
    %v438 = vmul.f32 %v435, %v437
    %v439 = vadd.f32 %v435, %v438
    %vm440 = vweird.f32 %v419
    %vm441 = vweird.f32 %v435
    %vm442 = vmor %vm440, %vm441
    %v443 = vsel %vm442, %v435, %v439
    %v444 = vand.u32 2147483647, %v419
    %vm445 = vcmp.eq.f32.partialorder %v444, 8.507059e+37
    %v446 = vand.u32 %v419, 2147483648
    %v447 = vor.u32 1.1754944e-38, %v446
    %v448 = vsel %vm445, %v447, %v443
    %v449 = vmul.f32 1.0, %v448
    %v450 = vtanh.pop %v411
    %v451 = vmul.f32 %v434, %v355
    %453 = vrot.lane.b32.xlu0 %v450, 64
    %v454 = vpop.permute.xlu0 %453
    %v456 = vmul.f32 %v434, %v454
    %458 = vrot.lane.b32.xlu0 %v456, 64
    %v459 = vpop.permute.xlu0 %458
    %v461 = vadd.f32 %v451, %v459
    %v462 = vtanh.pop %v461
    %464 = vrot.lane.b32.xlu0 %v462, 64
    %v465 = vpop.permute.xlu0 %464
    %v467 = vmul.f32 %v449, %v465
    %s468 = smul.u32 2, 2
    %s469 = smul.addr %s468, 8
    %s470 = scalar_lea.vmem [#allocation2], %s469
    %v471 = vld [vmem:[%s470] sm:$0xff]
    %v472 = vld [vmem:[%s470 + $0x8] sm:$0xff]
    %v474 = vsel %vm260, %v467, 0
    %476 = vmatpush.msra.mxu0 0.0
    %477 = vmatpush.msra.mxu0 0.0
    %478 = vmatpush.msra.mxu0 0.0
    %479 = vmatpush.msra.mxu0 0.0
    %480 = vmatpush.msra.mxu0 0.0
    %481 = vmatpush.msra.mxu0 0.0
    %482 = vmatpush.msra.mxu0 0.0
    %483 = vmatpush.msra.mxu0 0.0
    %484 = vmatpush.msra.mxu0 %v253
    %485 = vmatpush.msra.mxu0 %v251
    %486 = vmatpush.msra.mxu0 %v249
    %487 = vmatpush.msra.mxu0 %v247
    %488 = vmatpush.msra.mxu0 %v245
    %489 = vmatpush.msra.mxu0 %v243
    %490 = vmatpush.msra.mxu0 %v241
    %491 = vmatpush.msra.mxu0 %v239
    %492 = vmatmul.f32.gmra.mxu0 %v474
    %v493 = vpop.f32.mrf.mxu0
    %v494 = vadd.f32 0.0, %v493
    %495 = vdwg.mxu0
    %496 = vmatpush.msra.mxu0 0.0
    %497 = vmatpush.msra.mxu0 0.0
    %498 = vmatpush.msra.mxu0 0.0
    %499 = vmatpush.msra.mxu0 0.0
    %500 = vmatpush.msra.mxu0 0.0
    %501 = vmatpush.msra.mxu0 0.0
    %502 = vmatpush.msra.mxu0 0.0
    %503 = vmatpush.msra.mxu0 0.0
    %504 = vmatpush.msra.mxu0 %v254
    %505 = vmatpush.msra.mxu0 %v252
    %506 = vmatpush.msra.mxu0 %v250
    %507 = vmatpush.msra.mxu0 %v248
    %508 = vmatpush.msra.mxu0 %v246
    %509 = vmatpush.msra.mxu0 %v244
    %510 = vmatpush.msra.mxu0 %v242
    %511 = vmatpush.msra.mxu0 %v240
    %512 = vmatmul.f32.gmra.mxu0 %v474
    %v513 = vpop.f32.mrf.mxu0
    %v514 = vadd.f32 0.0, %v513
    %515 = vdwg.mxu0
    %v516 = vadd.f32 %v471, %v494
    %v517 = vadd.f32 %v472, %v514
    %v518 = vxor.u32 %v516, 2147483648
    %v519 = vxor.u32 %v517, 2147483648
    %v520 = vmul.f32 %v518, 1.442695
    %v521 = vpow.pop %v520
    %v522 = vmul.f32 %v519, 1.442695
    %v523 = vpow.pop %v522
    %v524 = vadd.f32 %v521, 1.0
    %v525 = vadd.f32 %v523, 1.0
    %v526 = vrcp.pop %v524
    %v527 = vmul.f32 %v524, %v526
    %v528 = vsub.f32 1.0, %v527
    %v529 = vmul.f32 %v526, %v528
    %v530 = vadd.f32 %v526, %v529
    %vm531 = vweird.f32 %v524
    %vm532 = vweird.f32 %v526
    %vm533 = vmor %vm531, %vm532
    %v534 = vsel %vm533, %v526, %v530
    %v535 = vand.u32 2147483647, %v524
    %vm536 = vcmp.eq.f32.partialorder %v535, 8.507059e+37
    %v537 = vand.u32 %v524, 2147483648
    %v538 = vor.u32 1.1754944e-38, %v537
    %v539 = vsel %vm536, %v538, %v534
    %v540 = vmul.f32 1.0, %v539
    %v541 = vrcp.pop %v525
    %v542 = vmul.f32 %v525, %v541
    %v543 = vsub.f32 1.0, %v542
    %v544 = vmul.f32 %v541, %v543
    %v545 = vadd.f32 %v541, %v544
    %vm546 = vweird.f32 %v525
    %vm547 = vweird.f32 %v541
    %vm548 = vmor %vm546, %vm547
    %v549 = vsel %vm548, %v541, %v545
    %v550 = vand.u32 2147483647, %v525
    %vm551 = vcmp.eq.f32.partialorder %v550, 8.507059e+37
    %v552 = vand.u32 %v525, 2147483648
    %v553 = vor.u32 1.1754944e-38, %v552
    %v554 = vsel %vm551, %v553, %v549
    %v555 = vmul.f32 1.0, %v554
    %v556 = vtanh.pop %v517
    %v557 = vmul.f32 %v540, %v461
    %559 = vrot.lane.b32.xlu0 %v556, 64
    %v560 = vpop.permute.xlu0 %559
    %v562 = vmul.f32 %v540, %v560
    %564 = vrot.lane.b32.xlu0 %v562, 64
    %v565 = vpop.permute.xlu0 %564
    %v567 = vadd.f32 %v557, %v565
    %v568 = vtanh.pop %v567
    %570 = vrot.lane.b32.xlu0 %v568, 64
    %v571 = vpop.permute.xlu0 %570
    %v573 = vmul.f32 %v555, %v571
    %s574 = smul.u32 3, 2
    %s575 = smul.addr %s574, 8
    %s576 = scalar_lea.vmem [#allocation2], %s575
    %v577 = vld [vmem:[%s576] sm:$0xff]
    %v578 = vld [vmem:[%s576 + $0x8] sm:$0xff]
    %v580 = vsel %vm260, %v573, 0
    %582 = vmatpush.msra.mxu0 0.0
    %583 = vmatpush.msra.mxu0 0.0
    %584 = vmatpush.msra.mxu0 0.0
    %585 = vmatpush.msra.mxu0 0.0
    %586 = vmatpush.msra.mxu0 0.0
    %587 = vmatpush.msra.mxu0 0.0
    %588 = vmatpush.msra.mxu0 0.0
    %589 = vmatpush.msra.mxu0 0.0
    %590 = vmatpush.msra.mxu0 %v253
    %591 = vmatpush.msra.mxu0 %v251
    %592 = vmatpush.msra.mxu0 %v249
    %593 = vmatpush.msra.mxu0 %v247
    %594 = vmatpush.msra.mxu0 %v245
    %595 = vmatpush.msra.mxu0 %v243
    %596 = vmatpush.msra.mxu0 %v241
    %597 = vmatpush.msra.mxu0 %v239
    %598 = vmatmul.f32.gmra.mxu0 %v580
    %v599 = vpop.f32.mrf.mxu0
    %v600 = vadd.f32 0.0, %v599
    %601 = vdwg.mxu0
    %602 = vmatpush.msra.mxu0 0.0
    %603 = vmatpush.msra.mxu0 0.0
    %604 = vmatpush.msra.mxu0 0.0
    %605 = vmatpush.msra.mxu0 0.0
    %606 = vmatpush.msra.mxu0 0.0
    %607 = vmatpush.msra.mxu0 0.0
    %608 = vmatpush.msra.mxu0 0.0
    %609 = vmatpush.msra.mxu0 0.0
    %610 = vmatpush.msra.mxu0 %v254
    %611 = vmatpush.msra.mxu0 %v252
    %612 = vmatpush.msra.mxu0 %v250
    %613 = vmatpush.msra.mxu0 %v248
    %614 = vmatpush.msra.mxu0 %v246
    %615 = vmatpush.msra.mxu0 %v244
    %616 = vmatpush.msra.mxu0 %v242
    %617 = vmatpush.msra.mxu0 %v240
    %618 = vmatmul.f32.gmra.mxu0 %v580
    %v619 = vpop.f32.mrf.mxu0
    %v620 = vadd.f32 0.0, %v619
    %621 = vdwg.mxu0
    %v622 = vadd.f32 %v577, %v600
    %v623 = vadd.f32 %v578, %v620
    %v624 = vxor.u32 %v622, 2147483648
    %v625 = vxor.u32 %v623, 2147483648
    %v626 = vmul.f32 %v624, 1.442695
    %v627 = vpow.pop %v626
    %v628 = vmul.f32 %v625, 1.442695
    %v629 = vpow.pop %v628
    %v630 = vadd.f32 %v627, 1.0
    %v631 = vadd.f32 %v629, 1.0
    %v632 = vrcp.pop %v630
    %v633 = vmul.f32 %v630, %v632
    %v634 = vsub.f32 1.0, %v633
    %v635 = vmul.f32 %v632, %v634
    %v636 = vadd.f32 %v632, %v635
    %vm637 = vweird.f32 %v630
    %vm638 = vweird.f32 %v632
    %vm639 = vmor %vm637, %vm638
    %v640 = vsel %vm639, %v632, %v636
    %v641 = vand.u32 2147483647, %v630
    %vm642 = vcmp.eq.f32.partialorder %v641, 8.507059e+37
    %v643 = vand.u32 %v630, 2147483648
    %v644 = vor.u32 1.1754944e-38, %v643
    %v645 = vsel %vm642, %v644, %v640
    %v646 = vmul.f32 1.0, %v645
    %v647 = vrcp.pop %v631
    %v648 = vmul.f32 %v631, %v647
    %v649 = vsub.f32 1.0, %v648
    %v650 = vmul.f32 %v647, %v649
    %v651 = vadd.f32 %v647, %v650
    %vm652 = vweird.f32 %v631
    %vm653 = vweird.f32 %v647
    %vm654 = vmor %vm652, %vm653
    %v655 = vsel %vm654, %v647, %v651
    %v656 = vand.u32 2147483647, %v631
    %vm657 = vcmp.eq.f32.partialorder %v656, 8.507059e+37
    %v658 = vand.u32 %v631, 2147483648
    %v659 = vor.u32 1.1754944e-38, %v658
    %v660 = vsel %vm657, %v659, %v655
    %v661 = vmul.f32 1.0, %v660
    %v662 = vtanh.pop %v623
    %v663 = vmul.f32 %v646, %v567
    %665 = vrot.lane.b32.xlu0 %v662, 64
    %v666 = vpop.permute.xlu0 %665
    %v668 = vmul.f32 %v646, %v666
    %670 = vrot.lane.b32.xlu0 %v668, 64
    %v671 = vpop.permute.xlu0 %670
    %v673 = vadd.f32 %v663, %v671
    %v674 = vtanh.pop %v673
    %676 = vrot.lane.b32.xlu0 %v674, 64
    %v677 = vpop.permute.xlu0 %676
    %v679 = vmul.f32 %v661, %v677
    %s680 = smul.u32 4, 2
    %s681 = smul.addr %s680, 8
    %s682 = scalar_lea.vmem [#allocation2], %s681
    %v683 = vld [vmem:[%s682] sm:$0xff]
    %v684 = vld [vmem:[%s682 + $0x8] sm:$0xff]
    %v686 = vsel %vm260, %v679, 0
    %688 = vmatpush.msra.mxu0 0.0
    %689 = vmatpush.msra.mxu0 0.0
    %690 = vmatpush.msra.mxu0 0.0
    %691 = vmatpush.msra.mxu0 0.0
    %692 = vmatpush.msra.mxu0 0.0
    %693 = vmatpush.msra.mxu0 0.0
    %694 = vmatpush.msra.mxu0 0.0
    %695 = vmatpush.msra.mxu0 0.0
    %696 = vmatpush.msra.mxu0 %v253
    %697 = vmatpush.msra.mxu0 %v251
    %698 = vmatpush.msra.mxu0 %v249
    %699 = vmatpush.msra.mxu0 %v247
    %700 = vmatpush.msra.mxu0 %v245
    %701 = vmatpush.msra.mxu0 %v243
    %702 = vmatpush.msra.mxu0 %v241
    %703 = vmatpush.msra.mxu0 %v239
    %704 = vmatmul.f32.gmra.mxu0 %v686
    %v705 = vpop.f32.mrf.mxu0
    %v706 = vadd.f32 0.0, %v705
    %707 = vdwg.mxu0
    %708 = vmatpush.msra.mxu0 0.0
    %709 = vmatpush.msra.mxu0 0.0
    %710 = vmatpush.msra.mxu0 0.0
    %711 = vmatpush.msra.mxu0 0.0
    %712 = vmatpush.msra.mxu0 0.0
    %713 = vmatpush.msra.mxu0 0.0
    %714 = vmatpush.msra.mxu0 0.0
    %715 = vmatpush.msra.mxu0 0.0
    %716 = vmatpush.msra.mxu0 %v254
    %717 = vmatpush.msra.mxu0 %v252
    %718 = vmatpush.msra.mxu0 %v250
    %719 = vmatpush.msra.mxu0 %v248
    %720 = vmatpush.msra.mxu0 %v246
    %721 = vmatpush.msra.mxu0 %v244
    %722 = vmatpush.msra.mxu0 %v242
    %723 = vmatpush.msra.mxu0 %v240
    %724 = vmatmul.f32.gmra.mxu0 %v686
    %v725 = vpop.f32.mrf.mxu0
    %v726 = vadd.f32 0.0, %v725
    %727 = vdwg.mxu0
    %v728 = vadd.f32 %v683, %v706
    %v729 = vadd.f32 %v684, %v726
    %v730 = vxor.u32 %v728, 2147483648
    %v731 = vxor.u32 %v729, 2147483648
    %v732 = vmul.f32 %v730, 1.442695
    %v733 = vpow.pop %v732
    %v734 = vmul.f32 %v731, 1.442695
    %v735 = vpow.pop %v734
    %v736 = vadd.f32 %v733, 1.0
    %v737 = vadd.f32 %v735, 1.0
    %v738 = vrcp.pop %v736
    %v739 = vmul.f32 %v736, %v738
    %v740 = vsub.f32 1.0, %v739
    %v741 = vmul.f32 %v738, %v740
    %v742 = vadd.f32 %v738, %v741
    %vm743 = vweird.f32 %v736
    %vm744 = vweird.f32 %v738
    %vm745 = vmor %vm743, %vm744
    %v746 = vsel %vm745, %v738, %v742
    %v747 = vand.u32 2147483647, %v736
    %vm748 = vcmp.eq.f32.partialorder %v747, 8.507059e+37
    %v749 = vand.u32 %v736, 2147483648
    %v750 = vor.u32 1.1754944e-38, %v749
    %v751 = vsel %vm748, %v750, %v746
    %v752 = vmul.f32 1.0, %v751
    %v753 = vrcp.pop %v737
    %v754 = vmul.f32 %v737, %v753
    %v755 = vsub.f32 1.0, %v754
    %v756 = vmul.f32 %v753, %v755
    %v757 = vadd.f32 %v753, %v756
    %vm758 = vweird.f32 %v737
    %vm759 = vweird.f32 %v753
    %vm760 = vmor %vm758, %vm759
    %v761 = vsel %vm760, %v753, %v757
    %v762 = vand.u32 2147483647, %v737
    %vm763 = vcmp.eq.f32.partialorder %v762, 8.507059e+37
    %v764 = vand.u32 %v737, 2147483648
    %v765 = vor.u32 1.1754944e-38, %v764
    %v766 = vsel %vm763, %v765, %v761
    %v767 = vmul.f32 1.0, %v766
    %v768 = vtanh.pop %v729
    %v769 = vmul.f32 %v752, %v673
    %771 = vrot.lane.b32.xlu0 %v768, 64
    %v772 = vpop.permute.xlu0 %771
    %v774 = vmul.f32 %v752, %v772
    %776 = vrot.lane.b32.xlu0 %v774, 64
    %v777 = vpop.permute.xlu0 %776
    %v779 = vadd.f32 %v769, %v777
    %v780 = vtanh.pop %v779
    %782 = vrot.lane.b32.xlu0 %v780, 64
    %v783 = vpop.permute.xlu0 %782
    %v785 = vmul.f32 %v767, %v783
    %s786 = smul.u32 5, 2
    %s787 = smul.addr %s786, 8
    %s788 = scalar_lea.vmem [#allocation2], %s787
    %v789 = vld [vmem:[%s788] sm:$0xff]
    %v790 = vld [vmem:[%s788 + $0x8] sm:$0xff]
    %v792 = vsel %vm260, %v785, 0
    %794 = vmatpush.msra.mxu0 0.0
    %795 = vmatpush.msra.mxu0 0.0
    %796 = vmatpush.msra.mxu0 0.0
    %797 = vmatpush.msra.mxu0 0.0
    %798 = vmatpush.msra.mxu0 0.0
    %799 = vmatpush.msra.mxu0 0.0
    %800 = vmatpush.msra.mxu0 0.0
    %801 = vmatpush.msra.mxu0 0.0
    %802 = vmatpush.msra.mxu0 %v253
    %803 = vmatpush.msra.mxu0 %v251
    %804 = vmatpush.msra.mxu0 %v249
    %805 = vmatpush.msra.mxu0 %v247
    %806 = vmatpush.msra.mxu0 %v245
    %807 = vmatpush.msra.mxu0 %v243
    %808 = vmatpush.msra.mxu0 %v241
    %809 = vmatpush.msra.mxu0 %v239
    %810 = vmatmul.f32.gmra.mxu0 %v792
    %v811 = vpop.f32.mrf.mxu0
    %v812 = vadd.f32 0.0, %v811
    %813 = vdwg.mxu0
    %814 = vmatpush.msra.mxu0 0.0
    %815 = vmatpush.msra.mxu0 0.0
    %816 = vmatpush.msra.mxu0 0.0
    %817 = vmatpush.msra.mxu0 0.0
    %818 = vmatpush.msra.mxu0 0.0
    %819 = vmatpush.msra.mxu0 0.0
    %820 = vmatpush.msra.mxu0 0.0
    %821 = vmatpush.msra.mxu0 0.0
    %822 = vmatpush.msra.mxu0 %v254
    %823 = vmatpush.msra.mxu0 %v252
    %824 = vmatpush.msra.mxu0 %v250
    %825 = vmatpush.msra.mxu0 %v248
    %826 = vmatpush.msra.mxu0 %v246
    %827 = vmatpush.msra.mxu0 %v244
    %828 = vmatpush.msra.mxu0 %v242
    %829 = vmatpush.msra.mxu0 %v240
    %830 = vmatmul.f32.gmra.mxu0 %v792
    %v831 = vpop.f32.mrf.mxu0
    %v832 = vadd.f32 0.0, %v831
    %833 = vdwg.mxu0
    %v834 = vadd.f32 %v789, %v812
    %v835 = vadd.f32 %v790, %v832
    %v836 = vxor.u32 %v834, 2147483648
    %v837 = vxor.u32 %v835, 2147483648
    %v838 = vmul.f32 %v836, 1.442695
    %v839 = vpow.pop %v838
    %v840 = vmul.f32 %v837, 1.442695
    %v841 = vpow.pop %v840
    %v842 = vadd.f32 %v839, 1.0
    %v843 = vadd.f32 %v841, 1.0
    %v844 = vrcp.pop %v842
    %v845 = vmul.f32 %v842, %v844
    %v846 = vsub.f32 1.0, %v845
    %v847 = vmul.f32 %v844, %v846
    %v848 = vadd.f32 %v844, %v847
    %vm849 = vweird.f32 %v842
    %vm850 = vweird.f32 %v844
    %vm851 = vmor %vm849, %vm850
    %v852 = vsel %vm851, %v844, %v848
    %v853 = vand.u32 2147483647, %v842
    %vm854 = vcmp.eq.f32.partialorder %v853, 8.507059e+37
    %v855 = vand.u32 %v842, 2147483648
    %v856 = vor.u32 1.1754944e-38, %v855
    %v857 = vsel %vm854, %v856, %v852
    %v858 = vmul.f32 1.0, %v857
    %v859 = vrcp.pop %v843
    %v860 = vmul.f32 %v843, %v859
    %v861 = vsub.f32 1.0, %v860
    %v862 = vmul.f32 %v859, %v861
    %v863 = vadd.f32 %v859, %v862
    %vm864 = vweird.f32 %v843
    %vm865 = vweird.f32 %v859
    %vm866 = vmor %vm864, %vm865
    %v867 = vsel %vm866, %v859, %v863
    %v868 = vand.u32 2147483647, %v843
    %vm869 = vcmp.eq.f32.partialorder %v868, 8.507059e+37
    %v870 = vand.u32 %v843, 2147483648
    %v871 = vor.u32 1.1754944e-38, %v870
    %v872 = vsel %vm869, %v871, %v867
    %v873 = vmul.f32 1.0, %v872
    %v874 = vtanh.pop %v835
    %v875 = vmul.f32 %v858, %v779
    %877 = vrot.lane.b32.xlu0 %v874, 64
    %v878 = vpop.permute.xlu0 %877
    %v880 = vmul.f32 %v858, %v878
    %882 = vrot.lane.b32.xlu0 %v880, 64
    %v883 = vpop.permute.xlu0 %882
    %v885 = vadd.f32 %v875, %v883
    %v886 = vtanh.pop %v885
    %888 = vrot.lane.b32.xlu0 %v886, 64
    %v889 = vpop.permute.xlu0 %888
    %v891 = vmul.f32 %v873, %v889
    %s892 = smul.u32 6, 2
    %s893 = smul.addr %s892, 8
    %s894 = scalar_lea.vmem [#allocation2], %s893
    %v895 = vld [vmem:[%s894] sm:$0xff]
    %v896 = vld [vmem:[%s894 + $0x8] sm:$0xff]
    %v898 = vsel %vm260, %v891, 0
    %900 = vmatpush.msra.mxu0 0.0
    %901 = vmatpush.msra.mxu0 0.0
    %902 = vmatpush.msra.mxu0 0.0
    %903 = vmatpush.msra.mxu0 0.0
    %904 = vmatpush.msra.mxu0 0.0
    %905 = vmatpush.msra.mxu0 0.0
    %906 = vmatpush.msra.mxu0 0.0
    %907 = vmatpush.msra.mxu0 0.0
    %908 = vmatpush.msra.mxu0 %v253
    %909 = vmatpush.msra.mxu0 %v251
    %910 = vmatpush.msra.mxu0 %v249
    %911 = vmatpush.msra.mxu0 %v247
    %912 = vmatpush.msra.mxu0 %v245
    %913 = vmatpush.msra.mxu0 %v243
    %914 = vmatpush.msra.mxu0 %v241
    %915 = vmatpush.msra.mxu0 %v239
    %916 = vmatmul.f32.gmra.mxu0 %v898
    %v917 = vpop.f32.mrf.mxu0
    %v918 = vadd.f32 0.0, %v917
    %919 = vdwg.mxu0
    %920 = vmatpush.msra.mxu0 0.0
    %921 = vmatpush.msra.mxu0 0.0
    %922 = vmatpush.msra.mxu0 0.0
    %923 = vmatpush.msra.mxu0 0.0
    %924 = vmatpush.msra.mxu0 0.0
    %925 = vmatpush.msra.mxu0 0.0
    %926 = vmatpush.msra.mxu0 0.0
    %927 = vmatpush.msra.mxu0 0.0
    %928 = vmatpush.msra.mxu0 %v254
    %929 = vmatpush.msra.mxu0 %v252
    %930 = vmatpush.msra.mxu0 %v250
    %931 = vmatpush.msra.mxu0 %v248
    %932 = vmatpush.msra.mxu0 %v246
    %933 = vmatpush.msra.mxu0 %v244
    %934 = vmatpush.msra.mxu0 %v242
    %935 = vmatpush.msra.mxu0 %v240
    %936 = vmatmul.f32.gmra.mxu0 %v898
    %v937 = vpop.f32.mrf.mxu0
    %v938 = vadd.f32 0.0, %v937
    %939 = vdwg.mxu0
    %v940 = vadd.f32 %v895, %v918
    %v941 = vadd.f32 %v896, %v938
    %v942 = vxor.u32 %v940, 2147483648
    %v943 = vxor.u32 %v941, 2147483648
    %v944 = vmul.f32 %v942, 1.442695
    %v945 = vpow.pop %v944
    %v946 = vmul.f32 %v943, 1.442695
    %v947 = vpow.pop %v946
    %v948 = vadd.f32 %v945, 1.0
    %v949 = vadd.f32 %v947, 1.0
    %v950 = vrcp.pop %v948
    %v951 = vmul.f32 %v948, %v950
    %v952 = vsub.f32 1.0, %v951
    %v953 = vmul.f32 %v950, %v952
    %v954 = vadd.f32 %v950, %v953
    %vm955 = vweird.f32 %v948
    %vm956 = vweird.f32 %v950
    %vm957 = vmor %vm955, %vm956
    %v958 = vsel %vm957, %v950, %v954
    %v959 = vand.u32 2147483647, %v948
    %vm960 = vcmp.eq.f32.partialorder %v959, 8.507059e+37
    %v961 = vand.u32 %v948, 2147483648
    %v962 = vor.u32 1.1754944e-38, %v961
    %v963 = vsel %vm960, %v962, %v958
    %v964 = vmul.f32 1.0, %v963
    %v965 = vrcp.pop %v949
    %v966 = vmul.f32 %v949, %v965
    %v967 = vsub.f32 1.0, %v966
    %v968 = vmul.f32 %v965, %v967
    %v969 = vadd.f32 %v965, %v968
    %vm970 = vweird.f32 %v949
    %vm971 = vweird.f32 %v965
    %vm972 = vmor %vm970, %vm971
    %v973 = vsel %vm972, %v965, %v969
    %v974 = vand.u32 2147483647, %v949
    %vm975 = vcmp.eq.f32.partialorder %v974, 8.507059e+37
    %v976 = vand.u32 %v949, 2147483648
    %v977 = vor.u32 1.1754944e-38, %v976
    %v978 = vsel %vm975, %v977, %v973
    %v979 = vmul.f32 1.0, %v978
    %v980 = vtanh.pop %v941
    %v981 = vmul.f32 %v964, %v885
    %983 = vrot.lane.b32.xlu0 %v980, 64
    %v984 = vpop.permute.xlu0 %983
    %v986 = vmul.f32 %v964, %v984
    %988 = vrot.lane.b32.xlu0 %v986, 64
    %v989 = vpop.permute.xlu0 %988
    %v991 = vadd.f32 %v981, %v989
    %v992 = vtanh.pop %v991
    %994 = vrot.lane.b32.xlu0 %v992, 64
    %v995 = vpop.permute.xlu0 %994
    %v997 = vmul.f32 %v979, %v995
    %s998 = smul.u32 7, 2
    %s999 = smul.addr %s998, 8
    %s1000 = scalar_lea.vmem [#allocation2], %s999
    %v1001 = vld [vmem:[%s1000] sm:$0xff]
    %v1002 = vld [vmem:[%s1000 + $0x8] sm:$0xff]
    %v1004 = vsel %vm260, %v997, 0
    %1006 = vmatpush.msra.mxu0 0.0
    %1007 = vmatpush.msra.mxu0 0.0
    %1008 = vmatpush.msra.mxu0 0.0
    %1009 = vmatpush.msra.mxu0 0.0
    %1010 = vmatpush.msra.mxu0 0.0
    %1011 = vmatpush.msra.mxu0 0.0
    %1012 = vmatpush.msra.mxu0 0.0
    %1013 = vmatpush.msra.mxu0 0.0
    %1014 = vmatpush.msra.mxu0 %v253
    %1015 = vmatpush.msra.mxu0 %v251
    %1016 = vmatpush.msra.mxu0 %v249
    %1017 = vmatpush.msra.mxu0 %v247
    %1018 = vmatpush.msra.mxu0 %v245
    %1019 = vmatpush.msra.mxu0 %v243
    %1020 = vmatpush.msra.mxu0 %v241
    %1021 = vmatpush.msra.mxu0 %v239
    %1022 = vmatmul.f32.gmra.mxu0 %v1004
    %v1023 = vpop.f32.mrf.mxu0
    %v1024 = vadd.f32 0.0, %v1023
    %1025 = vdwg.mxu0
    %1026 = vmatpush.msra.mxu0 0.0
    %1027 = vmatpush.msra.mxu0 0.0
    %1028 = vmatpush.msra.mxu0 0.0
    %1029 = vmatpush.msra.mxu0 0.0
    %1030 = vmatpush.msra.mxu0 0.0
    %1031 = vmatpush.msra.mxu0 0.0
    %1032 = vmatpush.msra.mxu0 0.0
    %1033 = vmatpush.msra.mxu0 0.0
    %1034 = vmatpush.msra.mxu0 %v254
    %1035 = vmatpush.msra.mxu0 %v252
    %1036 = vmatpush.msra.mxu0 %v250
    %1037 = vmatpush.msra.mxu0 %v248
    %1038 = vmatpush.msra.mxu0 %v246
    %1039 = vmatpush.msra.mxu0 %v244
    %1040 = vmatpush.msra.mxu0 %v242
    %1041 = vmatpush.msra.mxu0 %v240
    %1042 = vmatmul.f32.gmra.mxu0 %v1004
    %v1043 = vpop.f32.mrf.mxu0
    %v1044 = vadd.f32 0.0, %v1043
    %1045 = vdwg.mxu0
    %v1046 = vadd.f32 %v1001, %v1024
    %v1047 = vadd.f32 %v1002, %v1044
    %v1048 = vxor.u32 %v1046, 2147483648
    %v1049 = vxor.u32 %v1047, 2147483648
    %v1050 = vmul.f32 %v1048, 1.442695
    %v1051 = vpow.pop %v1050
    %v1052 = vmul.f32 %v1049, 1.442695
    %v1053 = vpow.pop %v1052
    %v1054 = vadd.f32 %v1051, 1.0
    %v1055 = vadd.f32 %v1053, 1.0
    %v1056 = vrcp.pop %v1054
    %v1057 = vmul.f32 %v1054, %v1056
    %v1058 = vsub.f32 1.0, %v1057
    %v1059 = vmul.f32 %v1056, %v1058
    %v1060 = vadd.f32 %v1056, %v1059
    %vm1061 = vweird.f32 %v1054
    %vm1062 = vweird.f32 %v1056
    %vm1063 = vmor %vm1061, %vm1062
    %v1064 = vsel %vm1063, %v1056, %v1060
    %v1065 = vand.u32 2147483647, %v1054
    %vm1066 = vcmp.eq.f32.partialorder %v1065, 8.507059e+37
    %v1067 = vand.u32 %v1054, 2147483648
    %v1068 = vor.u32 1.1754944e-38, %v1067
    %v1069 = vsel %vm1066, %v1068, %v1064
    %v1070 = vmul.f32 1.0, %v1069
    %v1071 = vrcp.pop %v1055
    %v1072 = vmul.f32 %v1055, %v1071
    %v1073 = vsub.f32 1.0, %v1072
    %v1074 = vmul.f32 %v1071, %v1073
    %v1075 = vadd.f32 %v1071, %v1074
    %vm1076 = vweird.f32 %v1055
    %vm1077 = vweird.f32 %v1071
    %vm1078 = vmor %vm1076, %vm1077
    %v1079 = vsel %vm1078, %v1071, %v1075
    %v1080 = vand.u32 2147483647, %v1055
    %vm1081 = vcmp.eq.f32.partialorder %v1080, 8.507059e+37
    %v1082 = vand.u32 %v1055, 2147483648
    %v1083 = vor.u32 1.1754944e-38, %v1082
    %v1084 = vsel %vm1081, %v1083, %v1079
    %v1085 = vmul.f32 1.0, %v1084
    %v1086 = vtanh.pop %v1047
    %v1087 = vmul.f32 %v1070, %v991
    %1089 = vrot.lane.b32.xlu0 %v1086, 64
    %v1090 = vpop.permute.xlu0 %1089
    %v1092 = vmul.f32 %v1070, %v1090
    %1094 = vrot.lane.b32.xlu0 %v1092, 64
    %v1095 = vpop.permute.xlu0 %1094
    %v1097 = vadd.f32 %v1087, %v1095
    %v1098 = vtanh.pop %v1097
    %1100 = vrot.lane.b32.xlu0 %v1098, 64
    %v1101 = vpop.permute.xlu0 %1100
    %v1103 = vmul.f32 %v1085, %v1101
    %v1104 = vld [vmem:[#allocation9] sm:$0xff]
    %v1105 = vld [vmem:[#allocation9 + $0x8] sm:$0xff]
    %v1106 = vld [vmem:[#allocation9 + $0x10] sm:$0xff]
    %v1107 = vld [vmem:[#allocation9 + $0x18] sm:$0xff]
    %v1108 = vld [vmem:[#allocation9 + $0x20] sm:$0xff]
    %v1109 = vld [vmem:[#allocation9 + $0x28] sm:$0xff]
    %v1110 = vld [vmem:[#allocation9 + $0x30] sm:$0xff]
    %v1111 = vld [vmem:[#allocation9 + $0x38] sm:$0xff]
    %v1112 = vld [vmem:[%s5] sm:$0x1]
    %v1114 = vperm.slane %v1112, 0
    %v1117 = vsel %vm260, %v1103, 0
    %1119 = vmatpush.msra.mxu0 0.0
    %1120 = vmatpush.msra.mxu0 0.0
    %1121 = vmatpush.msra.mxu0 0.0
    %1122 = vmatpush.msra.mxu0 0.0
    %1123 = vmatpush.msra.mxu0 0.0
    %1124 = vmatpush.msra.mxu0 0.0
    %1125 = vmatpush.msra.mxu0 0.0
    %1126 = vmatpush.msra.mxu0 0.0
    %1127 = vmatpush.msra.mxu0 %v1111
    %1128 = vmatpush.msra.mxu0 %v1110
    %1129 = vmatpush.msra.mxu0 %v1109
    %1130 = vmatpush.msra.mxu0 %v1108
    %1131 = vmatpush.msra.mxu0 %v1107
    %1132 = vmatpush.msra.mxu0 %v1106
    %1133 = vmatpush.msra.mxu0 %v1105
    %1134 = vmatpush.msra.mxu0 %v1104
    %1135 = vmatmul.f32.gmra.mxu0 %v1117
    %v1136 = vpop.f32.mrf.mxu0
    %v1137 = vadd.f32 %v1114, %v1136
    %1138 = vdwg.mxu0
    %1139 = vst [vmem:[#allocation11] sm:$0xff] %v1137
    // Predicated region
    $region42: #{tpu_custom_call.1} parent=1 // pred_check
      _
    $region43: #{tpu_custom_call.1} parent=1 // pred_check_branch
      %1141 = sbr.rel (0) target = $region45
    $region44: #{tpu_custom_call.1} parent=1 // pred_region
      %1143 = vsyncadd [#allocation5], 0
      %s1145 = sshll.u32 [#allocation11], 4
      %s1146 = int_to_ptr.vmem [resolvable:$true] %s1145
      %s1147 = sshll.u32 %s6, 4
      %s1148 = int_to_ptr.hbm [resolvable:$true] %s1147
      %1150 = dma.vmem_to_hbm [thread:$0]  %s1146, 128, %s1148, [#allocation5]
    $region45: #{tpu_custom_call.1} parent=1 // pred_fallthru
      _
    // Predicated region
    $region46: #{tpu_custom_call.1} parent=1 // pred_check
      _
    $region47: #{tpu_custom_call.1} parent=1 // pred_check_branch
      %1152 = sbr.rel (0) target = $region49
    $region48: #{tpu_custom_call.1} parent=1 // pred_region
      %1154 = dma.done [#allocation5], 128
    $region49: #{tpu_custom_call.1} parent=1 // pred_fallthru
      _
    %1155 = vsyncpa [#allocation4], 1
    %1156 = vsyncpa [#allocation7], 1
    %1157 = vsyncpa [#allocation10], 1
    %1158 = vsyncpa [#allocation5], 1

</llo_original>
